<compile_context>
chip_gen: v5e
topology: v5e:2x2
jax: 0.10.0
libtpu: 0.0.40
codegen_flags: <defaults>
</compile_context>

<pallas_src>
import functools
import math

import jax
import jax.numpy as jnp
import numpy as np
from jax.experimental import pallas as pl
from jax.experimental.pallas import tpu as pltpu


def _rup(x, m):
    return (x + m - 1) // m * m


# --------------------------------------------------------------------------------------
# Kernel
# --------------------------------------------------------------------------------------
def dlrm_kernel(*refs, num_cat, emb_dim, pairs, pd_pad, fold, w_dtype):
    num_ref = refs[0]
    emb_refs = refs[1:1 + num_cat]
    wrefs = refs[1 + num_cat:-1]
    out_ref = refs[-1]
    if fold:
        (bw0, bb0, bw1, bb1, w0bot, w0int, tb0, tw1, tb1, tw2, tb2) = wrefs
    else:
        (bw0, bb0, bw1, bb1, w0bot, red, w0p, tb0, tw1, tb1, tw2, tb2) = wrefs

    f32 = jnp.float32
    D = emb_dim
    TB = num_ref.shape[0]

    # ---- bottom MLP: (Linear + ReLU) x 2, f32 accumulation on the MXU ----
    x = num_ref[...]
    h = jnp.dot(x, bw0[...], preferred_element_type=f32) + bb0[...].astype(f32)
    h = jnp.maximum(h, 0.0).astype(w_dtype)
    bot = jnp.dot(h, bw1[...], preferred_element_type=f32) + bb1[...].astype(f32)
    bot = jnp.maximum(bot, 0.0).astype(w_dtype)             # [TB, Db]; lanes >= D exact zeros

    # ---- pairwise 'dot' interaction ----
    # a_side[:, q*D:(q+1)*D] = feats[i_q], b_side[:, q*D:(q+1)*D] = feats[j_q] with pairs
    # in torch.tril_indices (strict lower triangle) order.  Built by lane-concatenation
    # of D-wide blocks: stays in vregs, feeds the VPU multiply + MXU reduction directly
    # (no selector matmuls, no VMEM scratch, no masked partial stores).
    feats = [bot[:, :D]] + [emb_refs[c][...] for c in range(num_cat)]
    a_blocks = [feats[i] for (i, _) in pairs]
    b_blocks = [feats[j] for (_, j) in pairs]
    if pd_pad:
        zpad = jnp.zeros((TB, pd_pad), w_dtype)
        a_blocks.append(zpad)
        b_blocks.append(zpad)
    a_side = jnp.concatenate(a_blocks, axis=-1)              # [TB, PDp]
    b_side = jnp.concatenate(b_blocks, axis=-1)              # [TB, PDp]
    prod = a_side * b_side                                   # bf16 halves VALU pressure on v6e/v7x

    # ---- top MLP; first layer consumes (bot, interaction) directly ----
    if fold:
        # per-pair D-reduction folded into the expanded first-layer weight
        t_int = jnp.dot(prod, w0int[...], preferred_element_type=f32)
    else:
        # block-diagonal [P*D -> P] reduction matmul, then the original tw0 rows
        inter = jnp.dot(prod, red[...], preferred_element_type=f32).astype(w_dtype)
        t_int = jnp.dot(inter, w0p[...], preferred_element_type=f32)
    # (the '+1' interaction padding column is dropped: its input is the constant 0 and
    #  its weight row is zero-initialised by the module.)
    t = (jnp.dot(bot, w0bot[...], preferred_element_type=f32) + t_int
         + tb0[...].astype(f32))
    t = jnp.maximum(t, 0.0).astype(w_dtype)
    t = jnp.dot(t, tw1[...], preferred_element_type=f32) + tb1[...].astype(f32)
    t = jnp.maximum(t, 0.0).astype(w_dtype)
    out = jnp.dot(t, tw2[...], preferred_element_type=f32) + tb2[...].astype(f32)
    out_ref[...] = out.astype(out_ref.dtype)                 # lane-dense store in compute dtype


# --------------------------------------------------------------------------------------
# Parameter packing (host-side, once): pad weights to lane-dense multiples of 128 and
# pick the interaction formulation based on size.
# --------------------------------------------------------------------------------------
def pack_kernel_params(p, *, num_numerical, cat_sizes, bottom_sizes, top_sizes,
                       emb_dim, dtype=jnp.bfloat16, interaction_mode=None):
    C = len(cat_sizes)
    n = C + 1
    P = n * (n - 1) // 2
    D = emb_dim

    H0b = _rup(bottom_sizes[0], 128)      # bottom hidden
    Db = _rup(bottom_sizes[1], 128)       # bottom output (= emb_dim) lane width
    PD = P * D
    PDp = _rup(PD, 128)                   # interaction product lane width
    Pp = _rup(P, 128)                     # per-pair interaction lane width
    H0t = _rup(top_sizes[0], 128)
    H1t = _rup(top_sizes[1], 128)
    Op = _rup(top_sizes[2], 128)          # lane-dense output width

    itemsize = jnp.dtype(dtype).itemsize
    if interaction_mode is None:
        # Folding the per-pair reduction into the first top layer multiplies its K by D
        # and makes the weight P*D x H0t; only do it while that stays small.
        interaction_mode = "fold" if PDp * H0t * itemsize <= (4 << 20) else "reduce"
    assert interaction_mode in ("fold", "reduce")

    def pad_mat(a, rows, cols):
        out = np.zeros((rows, cols), np.float32)
        a = np.asarray(a, np.float32)
        out[:a.shape[0], :a.shape[1]] = a
        return jnp.asarray(out, dtype)

    def pad_bias(b, cols):
        out = np.zeros((1, cols), np.float32)
        b = np.asarray(b, np.float32)
        out[0, :b.shape[0]] = b
        return jnp.asarray(out, dtype)

    # NOTE (padding correctness): padded lanes of every activation are exact zeros because
    # the corresponding weight columns / bias lanes are zero-filled AND ReLU(0) == 0, and
    # padded rows of every downstream weight are zero-filled.  If the activation function
    # or the padding scheme changes, both sides must change together.
    kp = {
        "bw0": pad_mat(p["bw0"], num_numerical, H0b),
        "bb0": pad_bias(p["bb0"], H0b),
        "bw1": pad_mat(p["bw1"], H0b, Db),
        "bb1": pad_bias(p["bb1"], Db),
    }

    # Pairs in torch.tril_indices order: (1,0),(2,0),(2,1),(3,0),...
    pairs = tuple((i, j) for i in range(n) for j in range(i))

    tw0 = np.asarray(p["tw0"], np.float32)                   # [D + P + 1, H0], [in, out]
    kp["w0bot"] = pad_mat(tw0[:D, :], Db, H0t)
    if interaction_mode == "fold":
        kp["w0int"] = pad_mat(np.repeat(tw0[D:D + P, :], D, axis=0), PDp, H0t)
    else:
        red = np.zeros((PDp, Pp), np.float32)
        for q in range(P):
            red[q * D:(q + 1) * D, q] = 1.0                  # block-diagonal reduction
        kp["red"] = jnp.asarray(red, dtype)
        kp["w0p"] = pad_mat(tw0[D:D + P, :], Pp, H0t)
    kp["tb0"] = pad_bias(p["tb0"], H0t)
    kp["tw1"] = pad_mat(p["tw1"], H0t, H1t)
    kp["tb1"] = pad_bias(p["tb1"], H1t)
    kp["tw2"] = pad_mat(p["tw2"], H1t, Op)
    kp["tb2"] = pad_bias(p["tb2"], Op)
    kp["embeddings"] = [jnp.asarray(e, dtype) for e in p["embeddings"]]
    kp["pairs"] = pairs
    kp["interaction_mode"] = interaction_mode
    kp["dims"] = dict(C=C, D=D, P=P, H0b=H0b, Db=Db, PD=PD, PDp=PDp, Pp=Pp, H0t=H0t,
                      H1t=H1t, Op=Op, out_dim=top_sizes[-1], num_numerical=num_numerical)
    kp["dtype"] = dtype
    return kp


# --------------------------------------------------------------------------------------
# Forward wrapper
# --------------------------------------------------------------------------------------
def dlrm_forward(numerical, categorical, kp, *, block_b=512):
    dims = kp["dims"]
    C, D, Op = dims["C"], dims["D"], dims["Op"]
    dtype = kp["dtype"]
    fold = kp["interaction_mode"] == "fold"
    pairs = kp["pairs"]
    B = numerical.shape[0]

    # Embedding gather (data-dependent) stays in plain JAX; per-table blocks are passed
    # separately so no [B, C*D] concat is materialised in HBM.
    # TODO(synk): fuse the gather into the kernel (PrefetchScalarGridSpec over the index
    # tensor + manual make_async_copy row-gather from HBM tables into VMEM scratch) to
    # remove the extra HBM round-trip of the gathered embeddings.
    emb_outs = [kp["embeddings"][c][categorical[:, c]] for c in range(C)]
    numerical = numerical.astype(dtype)

    sub = 16 if jnp.dtype(dtype) == jnp.dtype(jnp.bfloat16) else 8   # sublane multiple
    TB = _rup(max(sub, min(block_b, B)), sub)
    B_pad = _rup(B, TB)
    if B_pad != B:
        numerical = jnp.pad(numerical, ((0, B_pad - B), (0, 0)))
        emb_outs = [jnp.pad(e, ((0, B_pad - B), (0, 0))) for e in emb_outs]
    nb = B_pad // TB          # v7x: keep nb a multiple of 2 so both TensorCores stay busy

    if fold:
        weight_names = ["bw0", "bb0", "bw1", "bb1", "w0bot", "w0int",
                        "tb0", "tw1", "tb1", "tw2", "tb2"]
    else:
        weight_names = ["bw0", "bb0", "bw1", "bb1", "w0bot", "red", "w0p",
                        "tb0", "tw1", "tb1", "tw2", "tb2"]
    weights = [kp[name] for name in weight_names]
    args = [numerical] + emb_outs + weights

    itemsize = jnp.dtype(dtype).itemsize
    weight_bytes = sum(int(np.prod(w.shape)) * jnp.dtype(w.dtype).itemsize for w in weights)

    # Advisory cost estimate for the XLA scheduler.
    if fold:
        inter_flops = 2 * (dims["Db"] + dims["PDp"]) * dims["H0t"]
    else:
        inter_flops = 2 * (dims["Db"] * dims["H0t"] + dims["PDp"] * dims["Pp"]
                           + dims["Pp"] * dims["H0t"])
    flops_row = (2 * dims["num_numerical"] * dims["H0b"]
                 + 2 * dims["H0b"] * dims["Db"]
                 + inter_flops
                 + 2 * dims["H0t"] * dims["H1t"]
                 + 2 * dims["H1t"] * Op)
    bytes_accessed = B_pad * (dims["num_numerical"] + C * D + Op) * itemsize + weight_bytes
    cost = pl.CostEstimate(flops=int(flops_row * B_pad), transcendentals=0,
                           bytes_accessed=int(bytes_accessed))

    kernel = functools.partial(dlrm_kernel, num_cat=C, emb_dim=D, pairs=pairs,
                               pd_pad=dims["PDp"] - dims["PD"], fold=fold, w_dtype=dtype)

    def batch_spec(feat):
        return pl.BlockSpec((TB, feat), lambda b: (b, 0))

    def run(single_buffer_weights):
        def weight_spec(arr):
            if single_buffer_weights:
                # Constant-index weights never change block: single-buffer them so they
                # do not occupy 2x their size in VMEM (matters on v7x's 64 MiB per TC,
                # where the resident weights are also replicated per core).
                return pl.BlockSpec(arr.shape, lambda b: (0, 0),
                                    pipeline_mode=pl.Buffered(1))
            return pl.BlockSpec(arr.shape, lambda b: (0, 0))

        in_specs = ([batch_spec(numerical.shape[1])]
                    + [batch_spec(D) for _ in range(C)]
                    + [weight_spec(w) for w in weights])
        out_specs = pl.BlockSpec((TB, Op), lambda b: (b, 0))

        # VMEM limit derived from the actual footprint (resident weights + double-buffered
        # activation tiles + in-kernel temporaries), clamped so it is safe on every
        # generation (v7x physical ceiling is 64 MiB per TensorCore).
        wbuf = 1 if single_buffer_weights else 2
        act_bytes = 2 * TB * (numerical.shape[1] + C * D + Op) * itemsize
        tmp_bytes = TB * (3 * dims["PDp"] + dims["H0b"] + dims["Db"]
                          + dims["H0t"] + dims["H1t"] + Op) * 4
        footprint = wbuf * weight_bytes + act_bytes + tmp_bytes
        vmem_limit = int(min(max(2 * footprint, 16 << 20), 64 << 20))

        out = pl.pallas_call(
            kernel,
            grid=(nb,),
            in_specs=in_specs,
            out_specs=out_specs,
            out_shape=jax.ShapeDtypeStruct((B_pad, Op), dtype),
            compiler_params=pltpu.CompilerParams(
                dimension_semantics=("parallel",),
                vmem_limit_bytes=vmem_limit),
            cost_estimate=cost,
        )(*args)
        return jax.block_until_ready(out)

    try:
        out = run(True)
    except Exception:
        # pl.Buffered(1) rejected by this jax/libtpu -> default (double-buffered) weights.
        out = run(False)

    return out[:B, :dims["out_dim"]].astype(jnp.float32)


# --------------------------------------------------------------------------------------
# Pure-JAX reference (original, unfolded math) + init matching the PyTorch module.
# --------------------------------------------------------------------------------------
def dlrm_reference(numerical, categorical, p):
    P_ = jax.lax.Precision.HIGHEST
    emb_outs = [p["embeddings"][c][categorical[:, c]] for c in range(len(p["embeddings"]))]
    h = jnp.maximum(jnp.dot(numerical, p["bw0"], precision=P_) + p["bb0"], 0.0)
    bot = jnp.maximum(jnp.dot(h, p["bw1"], precision=P_) + p["bb1"], 0.0)
    feats = [bot] + emb_outs
    n = len(feats)
    cols = [jnp.sum(feats[i] * feats[j], axis=-1, keepdims=True)
            for i in range(n) for j in range(i)]
    inter = jnp.concatenate(cols, axis=1)
    pad = jnp.zeros((bot.shape[0], 1), jnp.float32)
    top_in = jnp.concatenate([bot, inter, pad], axis=1)
    t = jnp.maximum(jnp.dot(top_in, p["tw0"], precision=P_) + p["tb0"], 0.0)
    t = jnp.maximum(jnp.dot(t, p["tw1"], precision=P_) + p["tb1"], 0.0)
    return jnp.dot(t, p["tw2"], precision=P_) + p["tb2"]


def init_params(key, num_numerical, cat_sizes, bottom_sizes, top_sizes, emb_dim):
    """Matches the module's _initialize_mlp_weights / _create_embeddings distributions."""
    assert len(bottom_sizes) == 2 and len(top_sizes) == 3, "script hardcodes 2 bottom / 3 top layers"
    assert bottom_sizes[-1] == emb_dim
    keys = iter(jax.random.split(key, 32))

    def linear(in_f, out_f):
        w = jax.random.normal(next(keys), (out_f, in_f), jnp.float32) * math.sqrt(2.0 / (in_f + out_f))
        b = jax.random.normal(next(keys), (out_f,), jnp.float32) * math.sqrt(1.0 / out_f)
        return w.T, b                       # [in, out], [out]

    n = len(cat_sizes) + 1
    top_in = n * (n - 1) // 2 + emb_dim + 1  # +1 interaction padding column ('dot')

    p = {}
    p["bw0"], p["bb0"] = linear(num_numerical, bottom_sizes[0])
    p["bw1"], p["bb1"] = linear(bottom_sizes[0], bottom_sizes[1])
    p["tw0"], p["tb0"] = linear(top_in, top_sizes[0])
    p["tw1"], p["tb1"] = linear(top_sizes[0], top_sizes[1])
    p["tw2"], p["tb2"] = linear(top_sizes[1], top_sizes[2])
    # nn.init.zeros_(self.top_mlp[0].weight[:, -1]) -> zero the padding input column.
    p["tw0"] = p["tw0"].at[-1, :].set(0.0)

    p["embeddings"] = []
    for size in cat_sizes:
        bound = math.sqrt(1.0 / size)
        p["embeddings"].append(jax.random.uniform(next(keys), (size, emb_dim), jnp.float32,
                                                  minval=-bound, maxval=bound))
    return p


if __name__ == "__main__":
    # Small, DLRM-consistent shapes (exercises multi-step grid + batch padding).
    B = 50
    num_numerical = 16
    cat_sizes = [100, 50, 30]
    emb_dim = 32
    bottom_sizes = [64, 32]      # last bottom MLP size must equal embedding_dim
    top_sizes = [64, 32, 1]

    key = jax.random.PRNGKey(0)
    k_params, kx, kc = jax.random.split(key, 3)

    raw_params = init_params(k_params, num_numerical, cat_sizes, bottom_sizes, top_sizes, emb_dim)
    numerical = jax.random.normal(kx, (B, num_numerical), dtype=jnp.float32)
    cat_keys = jax.random.split(kc, len(cat_sizes))
    categorical = jnp.stack(
        [jax.random.randint(k, (B,), 0, s, dtype=jnp.int32) for k, s in zip(cat_keys, cat_sizes)],
        axis=1)                  # [B, num_cat]

    ref = dlrm_reference(numerical, categorical, raw_params)

    # 1) f32 weights, folded-interaction path (auto-selected for small C*D): tight check.
    kp32 = pack_kernel_params(raw_params, num_numerical=num_numerical, cat_sizes=cat_sizes,
                              bottom_sizes=bottom_sizes, top_sizes=top_sizes,
                              emb_dim=emb_dim, dtype=jnp.float32)
    out32 = dlrm_forward(numerical, categorical, kp32, block_b=16)
    out32 = jax.block_until_ready(out32)
    assert out32.shape == (B, top_sizes[-1]), out32.shape
    assert np.allclose(np.asarray(out32), np.asarray(ref), atol=1e-2, rtol=1e-2), (
        float(np.max(np.abs(np.asarray(out32) - np.asarray(ref)))))

    # 2) bf16 weights/activations (recommended perf config on v6e/v7x) with the scalable
    #    reduction-matmul interaction path; f32 accumulation kept, so only a loose check.
    kp16 = pack_kernel_params(raw_params, num_numerical=num_numerical, cat_sizes=cat_sizes,
                              bottom_sizes=bottom_sizes, top_sizes=top_sizes,
                              emb_dim=emb_dim, dtype=jnp.bfloat16, interaction_mode="reduce")
    out16 = dlrm_forward(numerical, categorical, kp16, block_b=16)
    out16 = jax.block_until_ready(out16)
    assert out16.shape == (B, top_sizes[-1]), out16.shape
    assert np.allclose(np.asarray(out16), np.asarray(ref), atol=1e-1, rtol=1e-1), (
        float(np.max(np.abs(np.asarray(out16) - np.asarray(ref)))))

    print("KERNEL_OK")
</pallas_src>

<mosaic_0001>
module attributes {stable_mosaic.version = 11 : i64} {
  func.func @dlrm_kernel(%arg0: i32, %arg1: memref<16x16xf32, #tpu.memory_space<vmem>>, %arg2: memref<16x32xf32, #tpu.memory_space<vmem>>, %arg3: memref<16x32xf32, #tpu.memory_space<vmem>>, %arg4: memref<16x32xf32, #tpu.memory_space<vmem>>, %arg5: memref<16x128xf32, #tpu.memory_space<vmem>>, %arg6: memref<1x128xf32, #tpu.memory_space<vmem>>, %arg7: memref<128x128xf32, #tpu.memory_space<vmem>>, %arg8: memref<1x128xf32, #tpu.memory_space<vmem>>, %arg9: memref<128x128xf32, #tpu.memory_space<vmem>>, %arg10: memref<256x128xf32, #tpu.memory_space<vmem>>, %arg11: memref<1x128xf32, #tpu.memory_space<vmem>>, %arg12: memref<128x128xf32, #tpu.memory_space<vmem>>, %arg13: memref<1x128xf32, #tpu.memory_space<vmem>>, %arg14: memref<128x128xf32, #tpu.memory_space<vmem>>, %arg15: memref<1x128xf32, #tpu.memory_space<vmem>>, %arg16: memref<16x128xf32, #tpu.memory_space<vmem>>) attributes {dimension_semantics = [#tpu.dimension_semantics<parallel>], iteration_bounds = array<i64: 4>, scalar_prefetch = 0 : i64, scratch_operands = 0 : i64, tpu.core_type = #tpu.core_type<tc>, window_params = [{transform_indices = @transform_0, window_bounds = array<i64: 16, 16>}, {transform_indices = @transform_1, window_bounds = array<i64: 16, 32>}, {transform_indices = @transform_2, window_bounds = array<i64: 16, 32>}, {transform_indices = @transform_3, window_bounds = array<i64: 16, 32>}, {pipeline_mode = #tpu.pipeline_mode<synchronous>, transform_indices = @transform_4, window_bounds = array<i64: 16, 128>}, {pipeline_mode = #tpu.pipeline_mode<synchronous>, transform_indices = @transform_5, window_bounds = array<i64: 1, 128>}, {pipeline_mode = #tpu.pipeline_mode<synchronous>, transform_indices = @transform_6, window_bounds = array<i64: 128, 128>}, {pipeline_mode = #tpu.pipeline_mode<synchronous>, transform_indices = @transform_7, window_bounds = array<i64: 1, 128>}, {pipeline_mode = #tpu.pipeline_mode<synchronous>, transform_indices = @transform_8, window_bounds = array<i64: 128, 128>}, {pipeline_mode = #tpu.pipeline_mode<synchronous>, transform_indices = @transform_9, window_bounds = array<i64: 256, 128>}, {pipeline_mode = #tpu.pipeline_mode<synchronous>, transform_indices = @transform_10, window_bounds = array<i64: 1, 128>}, {pipeline_mode = #tpu.pipeline_mode<synchronous>, transform_indices = @transform_11, window_bounds = array<i64: 128, 128>}, {pipeline_mode = #tpu.pipeline_mode<synchronous>, transform_indices = @transform_12, window_bounds = array<i64: 1, 128>}, {pipeline_mode = #tpu.pipeline_mode<synchronous>, transform_indices = @transform_13, window_bounds = array<i64: 128, 128>}, {pipeline_mode = #tpu.pipeline_mode<synchronous>, transform_indices = @transform_14, window_bounds = array<i64: 1, 128>}, {transform_indices = @transform_15, window_bounds = array<i64: 16, 128>}]} {
    %c0 = arith.constant 0 : index
    %c0_0 = arith.constant 0 : index
    %0 = vector.load %arg1[%c0, %c0_0] : memref<16x16xf32, #tpu.memory_space<vmem>>, vector<16x16xf32>
    %c0_1 = arith.constant 0 : index
    %c0_2 = arith.constant 0 : index
    %1 = vector.load %arg5[%c0_1, %c0_2] : memref<16x128xf32, #tpu.memory_space<vmem>>, vector<16x128xf32>
    %cst = arith.constant dense<0.000000e+00> : vector<16x128xf32>
    %2 = tpu.matmul %0, %1, %cst {dimension_numbers = #tpu.dot_dimension_numbers<[1], [0], [0], [1], [0, 0, 1, 1], [], []>} : vector<16x16xf32>, vector<16x128xf32>, vector<16x128xf32> -> vector<16x128xf32>
    %c0_3 = arith.constant 0 : index
    %c0_4 = arith.constant 0 : index
    %3 = vector.load %arg6[%c0_3, %c0_4] : memref<1x128xf32, #tpu.memory_space<vmem>>, vector<1x128xf32>
    %4 = vector.broadcast %3 : vector<1x128xf32> to vector<16x128xf32>
    %5 = arith.addf %2, %4 : vector<16x128xf32>
    %cst_5 = arith.constant 0.000000e+00 : f32
    %6 = vector.broadcast %cst_5 : f32 to vector<16x128xf32>
    %7 = arith.maximumf %5, %6 : vector<16x128xf32>
    %c0_6 = arith.constant 0 : index
    %c0_7 = arith.constant 0 : index
    %8 = vector.load %arg7[%c0_6, %c0_7] : memref<128x128xf32, #tpu.memory_space<vmem>>, vector<128x128xf32>
    %cst_8 = arith.constant dense<0.000000e+00> : vector<16x128xf32>
    %9 = tpu.matmul %7, %8, %cst_8 {dimension_numbers = #tpu.dot_dimension_numbers<[1], [0], [0], [1], [0, 0, 1, 1], [], []>} : vector<16x128xf32>, vector<128x128xf32>, vector<16x128xf32> -> vector<16x128xf32>
    %c0_9 = arith.constant 0 : index
    %c0_10 = arith.constant 0 : index
    %10 = vector.load %arg8[%c0_9, %c0_10] : memref<1x128xf32, #tpu.memory_space<vmem>>, vector<1x128xf32>
    %11 = vector.broadcast %10 : vector<1x128xf32> to vector<16x128xf32>
    %12 = arith.addf %9, %11 : vector<16x128xf32>
    %cst_11 = arith.constant 0.000000e+00 : f32
    %13 = vector.broadcast %cst_11 : f32 to vector<16x128xf32>
    %14 = arith.maximumf %12, %13 : vector<16x128xf32>
    %15 = vector.extract_strided_slice %14 {offsets = [0, 0], sizes = [16, 32], strides = [1, 1]} : vector<16x128xf32> to vector<16x32xf32>
    %c0_12 = arith.constant 0 : index
    %c0_13 = arith.constant 0 : index
    %16 = vector.load %arg2[%c0_12, %c0_13] : memref<16x32xf32, #tpu.memory_space<vmem>>, vector<16x32xf32>
    %c0_14 = arith.constant 0 : index
    %c0_15 = arith.constant 0 : index
    %17 = vector.load %arg3[%c0_14, %c0_15] : memref<16x32xf32, #tpu.memory_space<vmem>>, vector<16x32xf32>
    %c0_16 = arith.constant 0 : index
    %c0_17 = arith.constant 0 : index
    %18 = vector.load %arg4[%c0_16, %c0_17] : memref<16x32xf32, #tpu.memory_space<vmem>>, vector<16x32xf32>
    %cst_18 = arith.constant 0.000000e+00 : f32
    %19 = vector.broadcast %cst_18 : f32 to vector<16x64xf32>
    %20 = tpu.concatenate %16, %17, %17, %18, %18, %18, %19 in 1 : vector<16x32xf32>, vector<16x32xf32>, vector<16x32xf32>, vector<16x32xf32>, vector<16x32xf32>, vector<16x32xf32>, vector<16x64xf32> -> vector<16x256xf32>
    %21 = tpu.concatenate %15, %15, %16, %15, %16, %17, %19 in 1 : vector<16x32xf32>, vector<16x32xf32>, vector<16x32xf32>, vector<16x32xf32>, vector<16x32xf32>, vector<16x32xf32>, vector<16x64xf32> -> vector<16x256xf32>
    %22 = arith.mulf %20, %21 : vector<16x256xf32>
    %c0_19 = arith.constant 0 : index
    %c0_20 = arith.constant 0 : index
    %23 = vector.load %arg10[%c0_19, %c0_20] : memref<256x128xf32, #tpu.memory_space<vmem>>, vector<256x128xf32>
    %cst_21 = arith.constant dense<0.000000e+00> : vector<16x128xf32>
    %24 = tpu.matmul %22, %23, %cst_21 {dimension_numbers = #tpu.dot_dimension_numbers<[1], [0], [0], [1], [0, 0, 1, 1], [], []>} : vector<16x256xf32>, vector<256x128xf32>, vector<16x128xf32> -> vector<16x128xf32>
    %c0_22 = arith.constant 0 : index
    %c0_23 = arith.constant 0 : index
    %25 = vector.load %arg9[%c0_22, %c0_23] : memref<128x128xf32, #tpu.memory_space<vmem>>, vector<128x128xf32>
    %cst_24 = arith.constant dense<0.000000e+00> : vector<16x128xf32>
    %26 = tpu.matmul %14, %25, %cst_24 {dimension_numbers = #tpu.dot_dimension_numbers<[1], [0], [0], [1], [0, 0, 1, 1], [], []>} : vector<16x128xf32>, vector<128x128xf32>, vector<16x128xf32> -> vector<16x128xf32>
    %27 = arith.addf %26, %24 : vector<16x128xf32>
    %c0_25 = arith.constant 0 : index
    %c0_26 = arith.constant 0 : index
    %28 = vector.load %arg11[%c0_25, %c0_26] : memref<1x128xf32, #tpu.memory_space<vmem>>, vector<1x128xf32>
    %29 = vector.broadcast %28 : vector<1x128xf32> to vector<16x128xf32>
    %30 = arith.addf %27, %29 : vector<16x128xf32>
    %cst_27 = arith.constant 0.000000e+00 : f32
    %31 = vector.broadcast %cst_27 : f32 to vector<16x128xf32>
    %32 = arith.maximumf %30, %31 : vector<16x128xf32>
    %c0_28 = arith.constant 0 : index
    %c0_29 = arith.constant 0 : index
    %33 = vector.load %arg12[%c0_28, %c0_29] : memref<128x128xf32, #tpu.memory_space<vmem>>, vector<128x128xf32>
    %cst_30 = arith.constant dense<0.000000e+00> : vector<16x128xf32>
    %34 = tpu.matmul %32, %33, %cst_30 {dimension_numbers = #tpu.dot_dimension_numbers<[1], [0], [0], [1], [0, 0, 1, 1], [], []>} : vector<16x128xf32>, vector<128x128xf32>, vector<16x128xf32> -> vector<16x128xf32>
    %c0_31 = arith.constant 0 : index
    %c0_32 = arith.constant 0 : index
    %35 = vector.load %arg13[%c0_31, %c0_32] : memref<1x128xf32, #tpu.memory_space<vmem>>, vector<1x128xf32>
    %36 = vector.broadcast %35 : vector<1x128xf32> to vector<16x128xf32>
    %37 = arith.addf %34, %36 : vector<16x128xf32>
    %cst_33 = arith.constant 0.000000e+00 : f32
    %38 = vector.broadcast %cst_33 : f32 to vector<16x128xf32>
    %39 = arith.maximumf %37, %38 : vector<16x128xf32>
    %c0_34 = arith.constant 0 : index
    %c0_35 = arith.constant 0 : index
    %40 = vector.load %arg14[%c0_34, %c0_35] : memref<128x128xf32, #tpu.memory_space<vmem>>, vector<128x128xf32>
    %cst_36 = arith.constant dense<0.000000e+00> : vector<16x128xf32>
    %41 = tpu.matmul %39, %40, %cst_36 {dimension_numbers = #tpu.dot_dimension_numbers<[1], [0], [0], [1], [0, 0, 1, 1], [], []>} : vector<16x128xf32>, vector<128x128xf32>, vector<16x128xf32> -> vector<16x128xf32>
    %c0_37 = arith.constant 0 : index
    %c0_38 = arith.constant 0 : index
    %42 = vector.load %arg15[%c0_37, %c0_38] : memref<1x128xf32, #tpu.memory_space<vmem>>, vector<1x128xf32>
    %43 = vector.broadcast %42 : vector<1x128xf32> to vector<16x128xf32>
    %44 = arith.addf %41, %43 : vector<16x128xf32>
    %c0_39 = arith.constant 0 : index
    %c0_40 = arith.constant 0 : index
    %45 = vector.load %arg16[%c0_39, %c0_40] : memref<16x128xf32, #tpu.memory_space<vmem>>, vector<16x128xf32>
    tpu.vector_store %arg16[%c0_39, %c0_40], %44 {strides = array<i32>} : memref<16x128xf32, #tpu.memory_space<vmem>>, vector<16x128xf32>,
    return
  }
  func.func @transform_0(%arg0: i32) -> (i32, i32) {
    %c0_i32 = arith.constant 0 : i32
    %c0_i32_0 = arith.constant 0 : i32
    return %arg0, %c0_i32 : i32, i32
  }
  func.func @transform_1(%arg0: i32) -> (i32, i32) {
    %c0_i32 = arith.constant 0 : i32
    %c0_i32_0 = arith.constant 0 : i32
    return %arg0, %c0_i32 : i32, i32
  }
  func.func @transform_2(%arg0: i32) -> (i32, i32) {
    %c0_i32 = arith.constant 0 : i32
    %c0_i32_0 = arith.constant 0 : i32
    return %arg0, %c0_i32 : i32, i32
  }
  func.func @transform_3(%arg0: i32) -> (i32, i32) {
    %c0_i32 = arith.constant 0 : i32
    %c0_i32_0 = arith.constant 0 : i32
    return %arg0, %c0_i32 : i32, i32
  }
  func.func @transform_4(%arg0: i32) -> (i32, i32) {
    %c0_i32 = arith.constant 0 : i32
    %c0_i32_0 = arith.constant 0 : i32
    %c0_i32_1 = arith.constant 0 : i32
    return %c0_i32, %c0_i32_0 : i32, i32
  }
  func.func @transform_5(%arg0: i32) -> (i32, i32) {
    %c0_i32 = arith.constant 0 : i32
    %c0_i32_0 = arith.constant 0 : i32
    %c0_i32_1 = arith.constant 0 : i32
    return %c0_i32, %c0_i32_0 : i32, i32
  }
  func.func @transform_6(%arg0: i32) -> (i32, i32) {
    %c0_i32 = arith.constant 0 : i32
    %c0_i32_0 = arith.constant 0 : i32
    %c0_i32_1 = arith.constant 0 : i32
    return %c0_i32, %c0_i32_0 : i32, i32
  }
  func.func @transform_7(%arg0: i32) -> (i32, i32) {
    %c0_i32 = arith.constant 0 : i32
    %c0_i32_0 = arith.constant 0 : i32
    %c0_i32_1 = arith.constant 0 : i32
    return %c0_i32, %c0_i32_0 : i32, i32
  }
  func.func @transform_8(%arg0: i32) -> (i32, i32) {
    %c0_i32 = arith.constant 0 : i32
    %c0_i32_0 = arith.constant 0 : i32
    %c0_i32_1 = arith.constant 0 : i32
    return %c0_i32, %c0_i32_0 : i32, i32
  }
  func.func @transform_9(%arg0: i32) -> (i32, i32) {
    %c0_i32 = arith.constant 0 : i32
    %c0_i32_0 = arith.constant 0 : i32
    %c0_i32_1 = arith.constant 0 : i32
    return %c0_i32, %c0_i32_0 : i32, i32
  }
  func.func @transform_10(%arg0: i32) -> (i32, i32) {
    %c0_i32 = arith.constant 0 : i32
    %c0_i32_0 = arith.constant 0 : i32
    %c0_i32_1 = arith.constant 0 : i32
    return %c0_i32, %c0_i32_0 : i32, i32
  }
  func.func @transform_11(%arg0: i32) -> (i32, i32) {
    %c0_i32 = arith.constant 0 : i32
    %c0_i32_0 = arith.constant 0 : i32
    %c0_i32_1 = arith.constant 0 : i32
    return %c0_i32, %c0_i32_0 : i32, i32
  }
  func.func @transform_12(%arg0: i32) -> (i32, i32) {
    %c0_i32 = arith.constant 0 : i32
    %c0_i32_0 = arith.constant 0 : i32
    %c0_i32_1 = arith.constant 0 : i32
    return %c0_i32, %c0_i32_0 : i32, i32
  }
  func.func @transform_13(%arg0: i32) -> (i32, i32) {
    %c0_i32 = arith.constant 0 : i32
    %c0_i32_0 = arith.constant 0 : i32
    %c0_i32_1 = arith.constant 0 : i32
    return %c0_i32, %c0_i32_0 : i32, i32
  }
  func.func @transform_14(%arg0: i32) -> (i32, i32) {
    %c0_i32 = arith.constant 0 : i32
    %c0_i32_0 = arith.constant 0 : i32
    %c0_i32_1 = arith.constant 0 : i32
    return %c0_i32, %c0_i32_0 : i32, i32
  }
  func.func @transform_15(%arg0: i32) -> (i32, i32) {
    %c0_i32 = arith.constant 0 : i32
    %c0_i32_0 = arith.constant 0 : i32
    return %arg0, %c0_i32 : i32, i32
  }
}

module attributes {stable_mosaic.version = 11 : i64} {
  func.func @dlrm_kernel(%arg0: i32, %arg1: memref<16x16xf32, #tpu.memory_space<vmem>>, %arg2: memref<16x32xf32, #tpu.memory_space<vmem>>, %arg3: memref<16x32xf32, #tpu.memory_space<vmem>>, %arg4: memref<16x32xf32, #tpu.memory_space<vmem>>, %arg5: memref<16x128xf32, #tpu.memory_space<vmem>>, %arg6: memref<1x128xf32, #tpu.memory_space<vmem>>, %arg7: memref<128x128xf32, #tpu.memory_space<vmem>>, %arg8: memref<1x128xf32, #tpu.memory_space<vmem>>, %arg9: memref<128x128xf32, #tpu.memory_space<vmem>>, %arg10: memref<256x128xf32, #tpu.memory_space<vmem>>, %arg11: memref<1x128xf32, #tpu.memory_space<vmem>>, %arg12: memref<128x128xf32, #tpu.memory_space<vmem>>, %arg13: memref<1x128xf32, #tpu.memory_space<vmem>>, %arg14: memref<128x128xf32, #tpu.memory_space<vmem>>, %arg15: memref<1x128xf32, #tpu.memory_space<vmem>>, %arg16: memref<16x128xf32, #tpu.memory_space<vmem>>) attributes {dimension_semantics = [#tpu.dimension_semantics<parallel>], iteration_bounds = array<i64: 4>, scalar_prefetch = 0 : i64, scratch_operands = 0 : i64, tpu.core_type = #tpu.core_type<tc>, window_params = [{transform_indices = @transform_0, window_bounds = array<i64: 16, 16>}, {transform_indices = @transform_1, window_bounds = array<i64: 16, 32>}, {transform_indices = @transform_2, window_bounds = array<i64: 16, 32>}, {transform_indices = @transform_3, window_bounds = array<i64: 16, 32>}, {pipeline_mode = #tpu.pipeline_mode<synchronous>, transform_indices = @transform_4, window_bounds = array<i64: 16, 128>}, {pipeline_mode = #tpu.pipeline_mode<synchronous>, transform_indices = @transform_5, window_bounds = array<i64: 1, 128>}, {pipeline_mode = #tpu.pipeline_mode<synchronous>, transform_indices = @transform_6, window_bounds = array<i64: 128, 128>}, {pipeline_mode = #tpu.pipeline_mode<synchronous>, transform_indices = @transform_7, window_bounds = array<i64: 1, 128>}, {pipeline_mode = #tpu.pipeline_mode<synchronous>, transform_indices = @transform_8, window_bounds = array<i64: 128, 128>}, {pipeline_mode = #tpu.pipeline_mode<synchronous>, transform_indices = @transform_9, window_bounds = array<i64: 256, 128>}, {pipeline_mode = #tpu.pipeline_mode<synchronous>, transform_indices = @transform_10, window_bounds = array<i64: 1, 128>}, {pipeline_mode = #tpu.pipeline_mode<synchronous>, transform_indices = @transform_11, window_bounds = array<i64: 128, 128>}, {pipeline_mode = #tpu.pipeline_mode<synchronous>, transform_indices = @transform_12, window_bounds = array<i64: 1, 128>}, {pipeline_mode = #tpu.pipeline_mode<synchronous>, transform_indices = @transform_13, window_bounds = array<i64: 128, 128>}, {pipeline_mode = #tpu.pipeline_mode<synchronous>, transform_indices = @transform_14, window_bounds = array<i64: 1, 128>}, {transform_indices = @transform_15, window_bounds = array<i64: 16, 128>}]} {
    %c0 = arith.constant 0 : index
    %c0_0 = arith.constant 0 : index
    %0 = vector.load %arg1[%c0, %c0_0] : memref<16x16xf32, #tpu.memory_space<vmem>>, vector<16x16xf32>
    %c0_1 = arith.constant 0 : index
    %c0_2 = arith.constant 0 : index
    %1 = vector.load %arg5[%c0_1, %c0_2] : memref<16x128xf32, #tpu.memory_space<vmem>>, vector<16x128xf32>
    %cst = arith.constant dense<0.000000e+00> : vector<16x128xf32>
    %2 = tpu.matmul %0, %1, %cst {dimension_numbers = #tpu.dot_dimension_numbers<[1], [0], [0], [1], [0, 0, 1, 1], [], []>} : vector<16x16xf32>, vector<16x128xf32>, vector<16x128xf32> -> vector<16x128xf32>
    %c0_3 = arith.constant 0 : index
    %c0_4 = arith.constant 0 : index
    %3 = vector.load %arg6[%c0_3, %c0_4] : memref<1x128xf32, #tpu.memory_space<vmem>>, vector<1x128xf32>
    %4 = vector.broadcast %3 : vector<1x128xf32> to vector<16x128xf32>
    %5 = arith.addf %2, %4 : vector<16x128xf32>
    %cst_5 = arith.constant 0.000000e+00 : f32
    %6 = vector.broadcast %cst_5 : f32 to vector<16x128xf32>
    %7 = arith.maximumf %5, %6 : vector<16x128xf32>
    %c0_6 = arith.constant 0 : index
    %c0_7 = arith.constant 0 : index
    %8 = vector.load %arg7[%c0_6, %c0_7] : memref<128x128xf32, #tpu.memory_space<vmem>>, vector<128x128xf32>
    %cst_8 = arith.constant dense<0.000000e+00> : vector<16x128xf32>
    %9 = tpu.matmul %7, %8, %cst_8 {dimension_numbers = #tpu.dot_dimension_numbers<[1], [0], [0], [1], [0, 0, 1, 1], [], []>} : vector<16x128xf32>, vector<128x128xf32>, vector<16x128xf32> -> vector<16x128xf32>
    %c0_9 = arith.constant 0 : index
    %c0_10 = arith.constant 0 : index
    %10 = vector.load %arg8[%c0_9, %c0_10] : memref<1x128xf32, #tpu.memory_space<vmem>>, vector<1x128xf32>
    %11 = vector.broadcast %10 : vector<1x128xf32> to vector<16x128xf32>
    %12 = arith.addf %9, %11 : vector<16x128xf32>
    %cst_11 = arith.constant 0.000000e+00 : f32
    %13 = vector.broadcast %cst_11 : f32 to vector<16x128xf32>
    %14 = arith.maximumf %12, %13 : vector<16x128xf32>
    %15 = vector.extract_strided_slice %14 {offsets = [0, 0], sizes = [16, 32], strides = [1, 1]} : vector<16x128xf32> to vector<16x32xf32>
    %c0_12 = arith.constant 0 : index
    %c0_13 = arith.constant 0 : index
    %16 = vector.load %arg2[%c0_12, %c0_13] : memref<16x32xf32, #tpu.memory_space<vmem>>, vector<16x32xf32>
    %c0_14 = arith.constant 0 : index
    %c0_15 = arith.constant 0 : index
    %17 = vector.load %arg3[%c0_14, %c0_15] : memref<16x32xf32, #tpu.memory_space<vmem>>, vector<16x32xf32>
    %c0_16 = arith.constant 0 : index
    %c0_17 = arith.constant 0 : index
    %18 = vector.load %arg4[%c0_16, %c0_17] : memref<16x32xf32, #tpu.memory_space<vmem>>, vector<16x32xf32>
    %cst_18 = arith.constant 0.000000e+00 : f32
    %19 = vector.broadcast %cst_18 : f32 to vector<16x64xf32>
    %20 = tpu.concatenate %16, %17, %17, %18, %18, %18, %19 in 1 : vector<16x32xf32>, vector<16x32xf32>, vector<16x32xf32>, vector<16x32xf32>, vector<16x32xf32>, vector<16x32xf32>, vector<16x64xf32> -> vector<16x256xf32>
    %21 = tpu.concatenate %15, %15, %16, %15, %16, %17, %19 in 1 : vector<16x32xf32>, vector<16x32xf32>, vector<16x32xf32>, vector<16x32xf32>, vector<16x32xf32>, vector<16x32xf32>, vector<16x64xf32> -> vector<16x256xf32>
    %22 = arith.mulf %20, %21 : vector<16x256xf32>
    %c0_19 = arith.constant 0 : index
    %c0_20 = arith.constant 0 : index
    %23 = vector.load %arg10[%c0_19, %c0_20] : memref<256x128xf32, #tpu.memory_space<vmem>>, vector<256x128xf32>
    %cst_21 = arith.constant dense<0.000000e+00> : vector<16x128xf32>
    %24 = tpu.matmul %22, %23, %cst_21 {dimension_numbers = #tpu.dot_dimension_numbers<[1], [0], [0], [1], [0, 0, 1, 1], [], []>} : vector<16x256xf32>, vector<256x128xf32>, vector<16x128xf32> -> vector<16x128xf32>
    %c0_22 = arith.constant 0 : index
    %c0_23 = arith.constant 0 : index
    %25 = vector.load %arg9[%c0_22, %c0_23] : memref<128x128xf32, #tpu.memory_space<vmem>>, vector<128x128xf32>
    %cst_24 = arith.constant dense<0.000000e+00> : vector<16x128xf32>
    %26 = tpu.matmul %14, %25, %cst_24 {dimension_numbers = #tpu.dot_dimension_numbers<[1], [0], [0], [1], [0, 0, 1, 1], [], []>} : vector<16x128xf32>, vector<128x128xf32>, vector<16x128xf32> -> vector<16x128xf32>
    %27 = arith.addf %26, %24 : vector<16x128xf32>
    %c0_25 = arith.constant 0 : index
    %c0_26 = arith.constant 0 : index
    %28 = vector.load %arg11[%c0_25, %c0_26] : memref<1x128xf32, #tpu.memory_space<vmem>>, vector<1x128xf32>
    %29 = vector.broadcast %28 : vector<1x128xf32> to vector<16x128xf32>
    %30 = arith.addf %27, %29 : vector<16x128xf32>
    %cst_27 = arith.constant 0.000000e+00 : f32
    %31 = vector.broadcast %cst_27 : f32 to vector<16x128xf32>
    %32 = arith.maximumf %30, %31 : vector<16x128xf32>
    %c0_28 = arith.constant 0 : index
    %c0_29 = arith.constant 0 : index
    %33 = vector.load %arg12[%c0_28, %c0_29] : memref<128x128xf32, #tpu.memory_space<vmem>>, vector<128x128xf32>
    %cst_30 = arith.constant dense<0.000000e+00> : vector<16x128xf32>
    %34 = tpu.matmul %32, %33, %cst_30 {dimension_numbers = #tpu.dot_dimension_numbers<[1], [0], [0], [1], [0, 0, 1, 1], [], []>} : vector<16x128xf32>, vector<128x128xf32>, vector<16x128xf32> -> vector<16x128xf32>
    %c0_31 = arith.constant 0 : index
    %c0_32 = arith.constant 0 : index
    %35 = vector.load %arg13[%c0_31, %c0_32] : memref<1x128xf32, #tpu.memory_space<vmem>>, vector<1x128xf32>
    %36 = vector.broadcast %35 : vector<1x128xf32> to vector<16x128xf32>
    %37 = arith.addf %34, %36 : vector<16x128xf32>
    %cst_33 = arith.constant 0.000000e+00 : f32
    %38 = vector.broadcast %cst_33 : f32 to vector<16x128xf32>
    %39 = arith.maximumf %37, %38 : vector<16x128xf32>
    %c0_34 = arith.constant 0 : index
    %c0_35 = arith.constant 0 : index
    %40 = vector.load %arg14[%c0_34, %c0_35] : memref<128x128xf32, #tpu.memory_space<vmem>>, vector<128x128xf32>
    %cst_36 = arith.constant dense<0.000000e+00> : vector<16x128xf32>
    %41 = tpu.matmul %39, %40, %cst_36 {dimension_numbers = #tpu.dot_dimension_numbers<[1], [0], [0], [1], [0, 0, 1, 1], [], []>} : vector<16x128xf32>, vector<128x128xf32>, vector<16x128xf32> -> vector<16x128xf32>
    %c0_37 = arith.constant 0 : index
    %c0_38 = arith.constant 0 : index
    %42 = vector.load %arg15[%c0_37, %c0_38] : memref<1x128xf32, #tpu.memory_space<vmem>>, vector<1x128xf32>
    %43 = vector.broadcast %42 : vector<1x128xf32> to vector<16x128xf32>
    %44 = arith.addf %41, %43 : vector<16x128xf32>
    %c0_39 = arith.constant 0 : index
    %c0_40 = arith.constant 0 : index
    %45 = vector.load %arg16[%c0_39, %c0_40] : memref<16x128xf32, #tpu.memory_space<vmem>>, vector<16x128xf32>
    tpu.vector_store %arg16[%c0_39, %c0_40], %44 {strides = array<i32>} : memref<16x128xf32, #tpu.memory_space<vmem>>, vector<16x128xf32>,
    return
  }
  func.func @transform_0(%arg0: i32) -> (i32, i32) {
    %c0_i32 = arith.constant 0 : i32
    %c0_i32_0 = arith.constant 0 : i32
    return %arg0, %c0_i32 : i32, i32
  }
  func.func @transform_1(%arg0: i32) -> (i32, i32) {
    %c0_i32 = arith.constant 0 : i32
    %c0_i32_0 = arith.constant 0 : i32
    return %arg0, %c0_i32 : i32, i32
  }
  func.func @transform_2(%arg0: i32) -> (i32, i32) {
    %c0_i32 = arith.constant 0 : i32
    %c0_i32_0 = arith.constant 0 : i32
    return %arg0, %c0_i32 : i32, i32
  }
  func.func @transform_3(%arg0: i32) -> (i32, i32) {
    %c0_i32 = arith.constant 0 : i32
    %c0_i32_0 = arith.constant 0 : i32
    return %arg0, %c0_i32 : i32, i32
  }
  func.func @transform_4(%arg0: i32) -> (i32, i32) {
    %c0_i32 = arith.constant 0 : i32
    %c0_i32_0 = arith.constant 0 : i32
    %c0_i32_1 = arith.constant 0 : i32
    return %c0_i32, %c0_i32_0 : i32, i32
  }
  func.func @transform_5(%arg0: i32) -> (i32, i32) {
    %c0_i32 = arith.constant 0 : i32
    %c0_i32_0 = arith.constant 0 : i32
    %c0_i32_1 = arith.constant 0 : i32
    return %c0_i32, %c0_i32_0 : i32, i32
  }
  func.func @transform_6(%arg0: i32) -> (i32, i32) {
    %c0_i32 = arith.constant 0 : i32
    %c0_i32_0 = arith.constant 0 : i32
    %c0_i32_1 = arith.constant 0 : i32
    return %c0_i32, %c0_i32_0 : i32, i32
  }
  func.func @transform_7(%arg0: i32) -> (i32, i32) {
    %c0_i32 = arith.constant 0 : i32
    %c0_i32_0 = arith.constant 0 : i32
    %c0_i32_1 = arith.constant 0 : i32
    return %c0_i32, %c0_i32_0 : i32, i32
  }
  func.func @transform_8(%arg0: i32) -> (i32, i32) {
    %c0_i32 = arith.constant 0 : i32
    %c0_i32_0 = arith.constant 0 : i32
    %c0_i32_1 = arith.constant 0 : i32
    return %c0_i32, %c0_i32_0 : i32, i32
  }
  func.func @transform_9(%arg0: i32) -> (i32, i32) {
    %c0_i32 = arith.constant 0 : i32
    %c0_i32_0 = arith.constant 0 : i32
    %c0_i32_1 = arith.constant 0 : i32
    return %c0_i32, %c0_i32_0 : i32, i32
  }
  func.func @transform_10(%arg0: i32) -> (i32, i32) {
    %c0_i32 = arith.constant 0 : i32
    %c0_i32_0 = arith.constant 0 : i32
    %c0_i32_1 = arith.constant 0 : i32
    return %c0_i32, %c0_i32_0 : i32, i32
  }
  func.func @transform_11(%arg0: i32) -> (i32, i32) {
    %c0_i32 = arith.constant 0 : i32
    %c0_i32_0 = arith.constant 0 : i32
    %c0_i32_1 = arith.constant 0 : i32
    return %c0_i32, %c0_i32_0 : i32, i32
  }
  func.func @transform_12(%arg0: i32) -> (i32, i32) {
    %c0_i32 = arith.constant 0 : i32
    %c0_i32_0 = arith.constant 0 : i32
    %c0_i32_1 = arith.constant 0 : i32
    return %c0_i32, %c0_i32_0 : i32, i32
  }
  func.func @transform_13(%arg0: i32) -> (i32, i32) {
    %c0_i32 = arith.constant 0 : i32
    %c0_i32_0 = arith.constant 0 : i32
    %c0_i32_1 = arith.constant 0 : i32
    return %c0_i32, %c0_i32_0 : i32, i32
  }
  func.func @transform_14(%arg0: i32) -> (i32, i32) {
    %c0_i32 = arith.constant 0 : i32
    %c0_i32_0 = arith.constant 0 : i32
    %c0_i32_1 = arith.constant 0 : i32
    return %c0_i32, %c0_i32_0 : i32, i32
  }
  func.func @transform_15(%arg0: i32) -> (i32, i32) {
    %c0_i32 = arith.constant 0 : i32
    %c0_i32_0 = arith.constant 0 : i32
    return %arg0, %c0_i32 : i32, i32
  }
}

</mosaic_0001>

<llo_original>
// kernel: tpu_custom_call.1
$region0: #{tpu_custom_call.1}
  #allocation0 [shape = 'u32[]', space=smem, size = 0x4, offset = 0x4, fixed_abs, tag = 'smem constant byte address 0x4 - core index']
  #allocation1 [shape = 'u32[72,128]{1,0:T(1,128)}', space=vmem, size = 0x9000, scoped, tag = 'internal scratch']
  %s0 = inlined_call_operand.vmem [shape: f32[64,16], index: 0, kind: input, shape index: {}]
  %s1 = inlined_call_operand.vmem [shape: f32[64,32], index: 1, kind: input, shape index: {}]
  %s2 = inlined_call_operand.vmem [shape: f32[64,32], index: 2, kind: input, shape index: {}]
  %s3 = inlined_call_operand.vmem [shape: f32[64,32], index: 3, kind: input, shape index: {}]
  %s4 = inlined_call_operand.vmem [shape: f32[16,128], index: 4, kind: input, shape index: {}]
  %s5 = inlined_call_operand.vmem [shape: f32[1,128], index: 5, kind: input, shape index: {}]
  %s6 = inlined_call_operand.hbm [shape: f32[128,128], index: 6, kind: input, shape index: {}]
  %s7 = inlined_call_operand.vmem [shape: f32[1,128], index: 7, kind: input, shape index: {}]
  %s8 = inlined_call_operand.hbm [shape: f32[128,128], index: 8, kind: input, shape index: {}]
  %s9 = inlined_call_operand.vmem [shape: f32[256,128], index: 9, kind: input, shape index: {}]
  %s10 = inlined_call_operand.vmem [shape: f32[1,128], index: 10, kind: input, shape index: {}]
  %s11 = inlined_call_operand.hbm [shape: f32[128,128], index: 11, kind: input, shape index: {}]
  %s12 = inlined_call_operand.vmem [shape: f32[1,128], index: 12, kind: input, shape index: {}]
  %s13 = inlined_call_operand.hbm [shape: f32[128,128], index: 13, kind: input, shape index: {}]
  %s14 = inlined_call_operand.vmem [shape: f32[1,128], index: 14, kind: input, shape index: {}]
  %s15 = inlined_call_operand.hbm [shape: f32[64,128], index: 15, kind: output, shape index: {}]
  %s16 = sld [smem:[#allocation0]]
  $region109: #{tpu_custom_call.1} parent=0
    _
  %s18 = ssub.s32 1, %s16
  %s19 = scalar_select 0, %s18, %s16
  $region1: #{tpu_custom_call.1} parent=0
    #allocation2 [shape = 'u8[65536]{0}', space=vmem, size = 0x10000, scoped, tag = 'input window, operand 6, single buffered']
    #allocation3 [shape = 's32[2]{0}', space=sflag, size = 0x8, scoped, tag = 'scoped memory for tpu_custom_call.1']
    #allocation4 [shape = 's32[2]{0}', space=sflag, size = 0x8, scoped, tag = 'scoped memory for tpu_custom_call.1']
    #allocation5 [shape = 'u8[65536]{0}', space=vmem, size = 0x10000, scoped, tag = 'input window, operand 8, single buffered']
    #allocation6 [shape = 's32[1]{0}', space=sflag, size = 0x4, scoped, tag = 'scoped memory for tpu_custom_call.1']
    #allocation7 [shape = 'u8[65536]{0}', space=vmem, size = 0x10000, scoped, tag = 'input window, operand 11, single buffered']
    #allocation8 [shape = 'u8[65536]{0}', space=vmem, size = 0x10000, scoped, tag = 'input window, operand 13, single buffered']
    #allocation9 [shape = 's32[1]{0}', space=sflag, size = 0x4, scoped, tag = 'scoped memory for tpu_custom_call.1']
    #allocation10 [shape = 'u8[16384]{0}', space=vmem, size = 0x4000, scoped, tag = 'output window, operand 0']
    %20 = vsyncpa [#allocation3], 0
    %21 = vsyncpa [#allocation6], 0
    %22 = vsyncpa [#allocation9], 0
    %23 = vsyncpa [#allocation4], 0
    %s24 = scalar_lea.sflag [#allocation4], 1
    %25 = vsyncpa %s24, 0
    loop: start=0, step=1, limit=6
    $region2: #{tpu_custom_call.1} parent=1 // loop_pre_header
      _
    $region3: #{tpu_custom_call.1} parent=1 // loop_header
      %s27 = sphi 0, %s31
      %p28 = scmp.ge.s32.totalorder %s27, 6
      %s37 = sphi 0, %s39
      %s40 = sphi 0, %s37
      %s41 = sphi 0, %s40
      %s57 = sphi 0, %s41
      %s63 = sphi 0, %s65
      %s66 = sphi 0, %s63
      %s67 = sphi 0, %s66
      %s83 = sphi 0, %s67
      %s89 = sphi 0, %s91
      %s92 = sphi 0, %s89
      %s93 = sphi 0, %s92
      %s109 = sphi 0, %s93
      %s115 = sphi 0, %s117
      %s118 = sphi 0, %s115
      %s119 = sphi 0, %s118
      %s135 = sphi 0, %s119
      %s139 = sphi 0, %s139
      %s141 = sphi 0, %s139
      %s142 = sphi 0, %s141
      %s156 = sphi 0, %s142
      %s160 = sphi 0, %s160
      %s162 = sphi 0, %s160
      %s163 = sphi 0, %s162
      %s177 = sphi 0, %s163
      %s181 = sphi 0, %s181
      %s183 = sphi 0, %s181
      %s184 = sphi 0, %s183
      %s198 = sphi 0, %s184
      %s202 = sphi 0, %s202
      %s204 = sphi 0, %s202
      %s205 = sphi 0, %s204
      %s219 = sphi 0, %s205
      %s223 = sphi 0, %s223
      %s225 = sphi 0, %s223
      %s226 = sphi 0, %s225
      %s240 = sphi 0, %s226
      %s244 = sphi 0, %s244
      %s246 = sphi 0, %s244
      %s247 = sphi 0, %s246
      %s261 = sphi 0, %s247
      %s265 = sphi 0, %s265
      %s267 = sphi 0, %s265
      %s268 = sphi 0, %s267
      %s282 = sphi 0, %s268
      %s286 = sphi 0, %s286
      %s288 = sphi 0, %s286
      %s289 = sphi 0, %s288
      %s303 = sphi 0, %s289
      %s307 = sphi 0, %s307
      %s309 = sphi 0, %s307
      %s310 = sphi 0, %s309
      %s324 = sphi 0, %s310
      %s328 = sphi 0, %s328
      %s330 = sphi 0, %s328
      %s331 = sphi 0, %s330
      %s345 = sphi 0, %s331
      %s349 = sphi 0, %s349
      %s351 = sphi 0, %s349
      %s352 = sphi 0, %s351
      %s366 = sphi 0, %s352
      %s372 = sphi 0, %s374
      %s375 = sphi 0, %s372
      %s376 = sphi 0, %s375
      %s392 = sphi 0, %s376
    $region4: #{tpu_custom_call.1} parent=1 // loop_header_branch
      %30 = sbr.rel (%p28) target = $region8
    $region5: #{tpu_custom_call.1} parent=1 // loop_body
      %s32 = ssub.s32 %s27, 1
      %s33 = ssub.s32 %s27, 2
      %s34 = sadd.s32 %s27, 1
      %s35 = ssub.s32 %s27, %s34
      %p36 = scmp.eq.s32.totalorder %s35, 0
      %s38 = sadd.s32 %s37, 1
      %s39 = scalar_select %p36, %s37, %s38
      %p42 = pneg %p36
      %p43 = scmp.eq.s32.totalorder %s27, 3
      %p44 = por %p42, %p43
      %p45 = scmp.ne.s32.totalorder %s37, %s40
      %p46 = scmp.eq.s32.totalorder %s27, 0
      %p47 = por %p45, %p46
      %p48 = scmp.ne.s32.totalorder %s37, %s40
      %p49 = scmp.eq.s32.totalorder %s32, 3
      %p50 = por %p48, %p49
      %p51 = scmp.ne.s32.totalorder %s40, %s41
      %p52 = scmp.eq.s32.totalorder %s32, 0
      %p53 = por %p51, %p52
      %p54 = scmp.ne.s32.totalorder %s40, %s41
      %p55 = scmp.eq.s32.totalorder %s33, 3
      %p56 = por %p54, %p55
      %p58 = scmp.ne.s32.totalorder %s41, %s57
      %p59 = scmp.eq.s32.totalorder %s33, 0
      %p60 = por %p58, %p59
      %s61 = ssub.s32 %s27, %s34
      %p62 = scmp.eq.s32.totalorder %s61, 0
      %s64 = sadd.s32 %s63, 1
      %s65 = scalar_select %p62, %s63, %s64
      %p68 = pneg %p62
      %p69 = scmp.eq.s32.totalorder %s27, 3
      %p70 = por %p68, %p69
      %p71 = scmp.ne.s32.totalorder %s63, %s66
      %p72 = scmp.eq.s32.totalorder %s27, 0
      %p73 = por %p71, %p72
      %p74 = scmp.ne.s32.totalorder %s63, %s66
      %p75 = scmp.eq.s32.totalorder %s32, 3
      %p76 = por %p74, %p75
      %p77 = scmp.ne.s32.totalorder %s66, %s67
      %p78 = scmp.eq.s32.totalorder %s32, 0
      %p79 = por %p77, %p78
      %p80 = scmp.ne.s32.totalorder %s66, %s67
      %p81 = scmp.eq.s32.totalorder %s33, 3
      %p82 = por %p80, %p81
      %p84 = scmp.ne.s32.totalorder %s67, %s83
      %p85 = scmp.eq.s32.totalorder %s33, 0
      %p86 = por %p84, %p85
      %s87 = ssub.s32 %s27, %s34
      %p88 = scmp.eq.s32.totalorder %s87, 0
      %s90 = sadd.s32 %s89, 1
      %s91 = scalar_select %p88, %s89, %s90
      %p94 = pneg %p88
      %p95 = scmp.eq.s32.totalorder %s27, 3
      %p96 = por %p94, %p95
      %p97 = scmp.ne.s32.totalorder %s89, %s92
      %p98 = scmp.eq.s32.totalorder %s27, 0
      %p99 = por %p97, %p98
      %p100 = scmp.ne.s32.totalorder %s89, %s92
      %p101 = scmp.eq.s32.totalorder %s32, 3
      %p102 = por %p100, %p101
      %p103 = scmp.ne.s32.totalorder %s92, %s93
      %p104 = scmp.eq.s32.totalorder %s32, 0
      %p105 = por %p103, %p104
      %p106 = scmp.ne.s32.totalorder %s92, %s93
      %p107 = scmp.eq.s32.totalorder %s33, 3
      %p108 = por %p106, %p107
      %p110 = scmp.ne.s32.totalorder %s93, %s109
      %p111 = scmp.eq.s32.totalorder %s33, 0
      %p112 = por %p110, %p111
      %s113 = ssub.s32 %s27, %s34
      %p114 = scmp.eq.s32.totalorder %s113, 0
      %s116 = sadd.s32 %s115, 1
      %s117 = scalar_select %p114, %s115, %s116
      %p120 = pneg %p114
      %p121 = scmp.eq.s32.totalorder %s27, 3
      %p122 = por %p120, %p121
      %p123 = scmp.ne.s32.totalorder %s115, %s118
      %p124 = scmp.eq.s32.totalorder %s27, 0
      %p125 = por %p123, %p124
      %p126 = scmp.ne.s32.totalorder %s115, %s118
      %p127 = scmp.eq.s32.totalorder %s32, 3
      %p128 = por %p126, %p127
      %p129 = scmp.ne.s32.totalorder %s118, %s119
      %p130 = scmp.eq.s32.totalorder %s32, 0
      %p131 = por %p129, %p130
      %p132 = scmp.ne.s32.totalorder %s118, %s119
      %p133 = scmp.eq.s32.totalorder %s33, 3
      %p134 = por %p132, %p133
      %p136 = scmp.ne.s32.totalorder %s119, %s135
      %p137 = scmp.eq.s32.totalorder %s33, 0
      %p138 = por %p136, %p137
      %s140 = sadd.s32 %s139, 1
      %p143 = scmp.eq.s32.totalorder %s27, 3
      %p144 = scmp.ne.s32.totalorder %s139, %s141
      %p145 = scmp.eq.s32.totalorder %s27, 0
      %p146 = por %p144, %p145
      %p147 = scmp.ne.s32.totalorder %s139, %s141
      %p148 = scmp.eq.s32.totalorder %s32, 3
      %p149 = por %p147, %p148
      %p150 = scmp.ne.s32.totalorder %s141, %s142
      %p151 = scmp.eq.s32.totalorder %s32, 0
      %p152 = por %p150, %p151
      %p153 = scmp.ne.s32.totalorder %s141, %s142
      %p154 = scmp.eq.s32.totalorder %s33, 3
      %p155 = por %p153, %p154
      %p157 = scmp.ne.s32.totalorder %s142, %s156
      %p158 = scmp.eq.s32.totalorder %s33, 0
      %p159 = por %p157, %p158
      %s161 = sadd.s32 %s160, 1
      %p164 = scmp.eq.s32.totalorder %s27, 3
      %p165 = scmp.ne.s32.totalorder %s160, %s162
      %p166 = scmp.eq.s32.totalorder %s27, 0
      %p167 = por %p165, %p166
      %p168 = scmp.ne.s32.totalorder %s160, %s162
      %p169 = scmp.eq.s32.totalorder %s32, 3
      %p170 = por %p168, %p169
      %p171 = scmp.ne.s32.totalorder %s162, %s163
      %p172 = scmp.eq.s32.totalorder %s32, 0
      %p173 = por %p171, %p172
      %p174 = scmp.ne.s32.totalorder %s162, %s163
      %p175 = scmp.eq.s32.totalorder %s33, 3
      %p176 = por %p174, %p175
      %p178 = scmp.ne.s32.totalorder %s163, %s177
      %p179 = scmp.eq.s32.totalorder %s33, 0
      %p180 = por %p178, %p179
      %s182 = sadd.s32 %s181, 1
      %p185 = scmp.eq.s32.totalorder %s27, 3
      %p186 = scmp.ne.s32.totalorder %s181, %s183
      %p187 = scmp.eq.s32.totalorder %s27, 0
      %p188 = por %p186, %p187
      %p189 = scmp.ne.s32.totalorder %s181, %s183
      %p190 = scmp.eq.s32.totalorder %s32, 3
      %p191 = por %p189, %p190
      %p192 = scmp.ne.s32.totalorder %s183, %s184
      %p193 = scmp.eq.s32.totalorder %s32, 0
      %p194 = por %p192, %p193
      %p195 = scmp.ne.s32.totalorder %s183, %s184
      %p196 = scmp.eq.s32.totalorder %s33, 3
      %p197 = por %p195, %p196
      %p199 = scmp.ne.s32.totalorder %s184, %s198
      %p200 = scmp.eq.s32.totalorder %s33, 0
      %p201 = por %p199, %p200
      %s203 = sadd.s32 %s202, 1
      %p206 = scmp.eq.s32.totalorder %s27, 3
      %p207 = scmp.ne.s32.totalorder %s202, %s204
      %p208 = scmp.eq.s32.totalorder %s27, 0
      %p209 = por %p207, %p208
      %p210 = scmp.ne.s32.totalorder %s202, %s204
      %p211 = scmp.eq.s32.totalorder %s32, 3
      %p212 = por %p210, %p211
      %p213 = scmp.ne.s32.totalorder %s204, %s205
      %p214 = scmp.eq.s32.totalorder %s32, 0
      %p215 = por %p213, %p214
      %p216 = scmp.ne.s32.totalorder %s204, %s205
      %p217 = scmp.eq.s32.totalorder %s33, 3
      %p218 = por %p216, %p217
      %p220 = scmp.ne.s32.totalorder %s205, %s219
      %p221 = scmp.eq.s32.totalorder %s33, 0
      %p222 = por %p220, %p221
      %s224 = sadd.s32 %s223, 1
      %p227 = scmp.eq.s32.totalorder %s27, 3
      %p228 = scmp.ne.s32.totalorder %s223, %s225
      %p229 = scmp.eq.s32.totalorder %s27, 0
      %p230 = por %p228, %p229
      %p231 = scmp.ne.s32.totalorder %s223, %s225
      %p232 = scmp.eq.s32.totalorder %s32, 3
      %p233 = por %p231, %p232
      %p234 = scmp.ne.s32.totalorder %s225, %s226
      %p235 = scmp.eq.s32.totalorder %s32, 0
      %p236 = por %p234, %p235
      %p237 = scmp.ne.s32.totalorder %s225, %s226
      %p238 = scmp.eq.s32.totalorder %s33, 3
      %p239 = por %p237, %p238
      %p241 = scmp.ne.s32.totalorder %s226, %s240
      %p242 = scmp.eq.s32.totalorder %s33, 0
      %p243 = por %p241, %p242
      %s245 = sadd.s32 %s244, 1
      %p248 = scmp.eq.s32.totalorder %s27, 3
      %p249 = scmp.ne.s32.totalorder %s244, %s246
      %p250 = scmp.eq.s32.totalorder %s27, 0
      %p251 = por %p249, %p250
      %p252 = scmp.ne.s32.totalorder %s244, %s246
      %p253 = scmp.eq.s32.totalorder %s32, 3
      %p254 = por %p252, %p253
      %p255 = scmp.ne.s32.totalorder %s246, %s247
      %p256 = scmp.eq.s32.totalorder %s32, 0
      %p257 = por %p255, %p256
      %p258 = scmp.ne.s32.totalorder %s246, %s247
      %p259 = scmp.eq.s32.totalorder %s33, 3
      %p260 = por %p258, %p259
      %p262 = scmp.ne.s32.totalorder %s247, %s261
      %p263 = scmp.eq.s32.totalorder %s33, 0
      %p264 = por %p262, %p263
      %s266 = sadd.s32 %s265, 1
      %p269 = scmp.eq.s32.totalorder %s27, 3
      %p270 = scmp.ne.s32.totalorder %s265, %s267
      %p271 = scmp.eq.s32.totalorder %s27, 0
      %p272 = por %p270, %p271
      %p273 = scmp.ne.s32.totalorder %s265, %s267
      %p274 = scmp.eq.s32.totalorder %s32, 3
      %p275 = por %p273, %p274
      %p276 = scmp.ne.s32.totalorder %s267, %s268
      %p277 = scmp.eq.s32.totalorder %s32, 0
      %p278 = por %p276, %p277
      %p279 = scmp.ne.s32.totalorder %s267, %s268
      %p280 = scmp.eq.s32.totalorder %s33, 3
      %p281 = por %p279, %p280
      %p283 = scmp.ne.s32.totalorder %s268, %s282
      %p284 = scmp.eq.s32.totalorder %s33, 0
      %p285 = por %p283, %p284
      %s287 = sadd.s32 %s286, 1
      %p290 = scmp.eq.s32.totalorder %s27, 3
      %p291 = scmp.ne.s32.totalorder %s286, %s288
      %p292 = scmp.eq.s32.totalorder %s27, 0
      %p293 = por %p291, %p292
      %p294 = scmp.ne.s32.totalorder %s286, %s288
      %p295 = scmp.eq.s32.totalorder %s32, 3
      %p296 = por %p294, %p295
      %p297 = scmp.ne.s32.totalorder %s288, %s289
      %p298 = scmp.eq.s32.totalorder %s32, 0
      %p299 = por %p297, %p298
      %p300 = scmp.ne.s32.totalorder %s288, %s289
      %p301 = scmp.eq.s32.totalorder %s33, 3
      %p302 = por %p300, %p301
      %p304 = scmp.ne.s32.totalorder %s289, %s303
      %p305 = scmp.eq.s32.totalorder %s33, 0
      %p306 = por %p304, %p305
      %s308 = sadd.s32 %s307, 1
      %p311 = scmp.eq.s32.totalorder %s27, 3
      %p312 = scmp.ne.s32.totalorder %s307, %s309
      %p313 = scmp.eq.s32.totalorder %s27, 0
      %p314 = por %p312, %p313
      %p315 = scmp.ne.s32.totalorder %s307, %s309
      %p316 = scmp.eq.s32.totalorder %s32, 3
      %p317 = por %p315, %p316
      %p318 = scmp.ne.s32.totalorder %s309, %s310
      %p319 = scmp.eq.s32.totalorder %s32, 0
      %p320 = por %p318, %p319
      %p321 = scmp.ne.s32.totalorder %s309, %s310
      %p322 = scmp.eq.s32.totalorder %s33, 3
      %p323 = por %p321, %p322
      %p325 = scmp.ne.s32.totalorder %s310, %s324
      %p326 = scmp.eq.s32.totalorder %s33, 0
      %p327 = por %p325, %p326
      %s329 = sadd.s32 %s328, 1
      %p332 = scmp.eq.s32.totalorder %s27, 3
      %p333 = scmp.ne.s32.totalorder %s328, %s330
      %p334 = scmp.eq.s32.totalorder %s27, 0
      %p335 = por %p333, %p334
      %p336 = scmp.ne.s32.totalorder %s328, %s330
      %p337 = scmp.eq.s32.totalorder %s32, 3
      %p338 = por %p336, %p337
      %p339 = scmp.ne.s32.totalorder %s330, %s331
      %p340 = scmp.eq.s32.totalorder %s32, 0
      %p341 = por %p339, %p340
      %p342 = scmp.ne.s32.totalorder %s330, %s331
      %p343 = scmp.eq.s32.totalorder %s33, 3
      %p344 = por %p342, %p343
      %p346 = scmp.ne.s32.totalorder %s331, %s345
      %p347 = scmp.eq.s32.totalorder %s33, 0
      %p348 = por %p346, %p347
      %s350 = sadd.s32 %s349, 1
      %p353 = scmp.eq.s32.totalorder %s27, 3
      %p354 = scmp.ne.s32.totalorder %s349, %s351
      %p355 = scmp.eq.s32.totalorder %s27, 0
      %p356 = por %p354, %p355
      %p357 = scmp.ne.s32.totalorder %s349, %s351
      %p358 = scmp.eq.s32.totalorder %s32, 3
      %p359 = por %p357, %p358
      %p360 = scmp.ne.s32.totalorder %s351, %s352
      %p361 = scmp.eq.s32.totalorder %s32, 0
      %p362 = por %p360, %p361
      %p363 = scmp.ne.s32.totalorder %s351, %s352
      %p364 = scmp.eq.s32.totalorder %s33, 3
      %p365 = por %p363, %p364
      %p367 = scmp.ne.s32.totalorder %s352, %s366
      %p368 = scmp.eq.s32.totalorder %s33, 0
      %p369 = por %p367, %p368
      %s370 = ssub.s32 %s27, %s34
      %p371 = scmp.eq.s32.totalorder %s370, 0
      %s373 = sadd.s32 %s372, 1
      %s374 = scalar_select %p371, %s372, %s373
      %p377 = pneg %p371
      %p378 = scmp.eq.s32.totalorder %s27, 3
      %p379 = por %p377, %p378
      %p380 = scmp.ne.s32.totalorder %s372, %s375
      %p381 = scmp.eq.s32.totalorder %s27, 0
      %p382 = por %p380, %p381
      %p383 = scmp.ne.s32.totalorder %s372, %s375
      %p384 = scmp.eq.s32.totalorder %s32, 3
      %p385 = por %p383, %p384
      %p386 = scmp.ne.s32.totalorder %s375, %s376
      %p387 = scmp.eq.s32.totalorder %s32, 0
      %p388 = por %p386, %p387
      %p389 = scmp.ne.s32.totalorder %s375, %s376
      %p390 = scmp.eq.s32.totalorder %s33, 3
      %p391 = por %p389, %p390
      %p393 = scmp.ne.s32.totalorder %s376, %s392
      %p394 = scmp.eq.s32.totalorder %s33, 0
      %p395 = por %p393, %p394
      %p396 = scmp.le.s32.totalorder 1, %s27
      %p397 = scmp.lt.s32.totalorder %s27, 5
      %p398 = pnand %p396, %p397
      %p399 = pneg %p398
      // Predicated region
      $region9: #{tpu_custom_call.1} parent=5 // pred_check
        _
      $region10: #{tpu_custom_call.1} parent=5 // pred_check_branch
        %401 = sbr.rel (%p398) target = $region12
      $region11: #{tpu_custom_call.1} parent=5 // pred_region
        %s402 = ssub.s32 %s27, 1
        // Predicated region
        $region13: #{tpu_custom_call.1} parent=11 // pred_check
          %p403 = pneg %p152
        $region14: #{tpu_custom_call.1} parent=11 // pred_check_branch
          %405 = sbr.rel (%p403) target = $region16
        $region15: #{tpu_custom_call.1} parent=11 // pred_region
          _
        $region16: #{tpu_custom_call.1} parent=11 // pred_fallthru
          _
        // Predicated region
        $region17: #{tpu_custom_call.1} parent=11 // pred_check
          %p406 = pneg %p173
        $region18: #{tpu_custom_call.1} parent=11 // pred_check_branch
          %408 = sbr.rel (%p406) target = $region20
        $region19: #{tpu_custom_call.1} parent=11 // pred_region
          _
        $region20: #{tpu_custom_call.1} parent=11 // pred_fallthru
          _
        // Predicated region
        $region21: #{tpu_custom_call.1} parent=11 // pred_check
          %p409 = pneg %p194
        $region22: #{tpu_custom_call.1} parent=11 // pred_check_branch
          %411 = sbr.rel (%p409) target = $region24
        $region23: #{tpu_custom_call.1} parent=11 // pred_region
          %413 = vsyncadd [#allocation3], 0
          %s414 = sshll.u32 %s6, 4
          %s415 = int_to_ptr.hbm [resolvable:$true] %s414
          %s416 = sshll.u32 [#allocation2], 4
          %s417 = int_to_ptr.vmem [resolvable:$true] %s416
          %422 = dma.hbm_to_vmem [thread:$0]  %s415, 2048, %s417, [#allocation3], 128, 128, 8
        $region24: #{tpu_custom_call.1} parent=11 // pred_fallthru
          _
        // Predicated region
        $region25: #{tpu_custom_call.1} parent=11 // pred_check
          %p423 = pneg %p215
        $region26: #{tpu_custom_call.1} parent=11 // pred_check_branch
          %425 = sbr.rel (%p423) target = $region28
        $region27: #{tpu_custom_call.1} parent=11 // pred_region
          _
        $region28: #{tpu_custom_call.1} parent=11 // pred_fallthru
          _
        // Predicated region
        $region29: #{tpu_custom_call.1} parent=11 // pred_check
          %p426 = pneg %p236
        $region30: #{tpu_custom_call.1} parent=11 // pred_check_branch
          %428 = sbr.rel (%p426) target = $region32
        $region31: #{tpu_custom_call.1} parent=11 // pred_region
          %430 = vsyncadd [#allocation6], 0
          %s431 = sshll.u32 %s8, 4
          %s432 = int_to_ptr.hbm [resolvable:$true] %s431
          %s433 = sshll.u32 [#allocation5], 4
          %s434 = int_to_ptr.vmem [resolvable:$true] %s433
          %439 = dma.hbm_to_vmem [thread:$0]  %s432, 2048, %s434, [#allocation6], 128, 128, 8
        $region32: #{tpu_custom_call.1} parent=11 // pred_fallthru
          _
        // Predicated region
        $region33: #{tpu_custom_call.1} parent=11 // pred_check
          %p440 = pneg %p257
        $region34: #{tpu_custom_call.1} parent=11 // pred_check_branch
          %442 = sbr.rel (%p440) target = $region36
        $region35: #{tpu_custom_call.1} parent=11 // pred_region
          _
        $region36: #{tpu_custom_call.1} parent=11 // pred_fallthru
          _
        // Predicated region
        $region37: #{tpu_custom_call.1} parent=11 // pred_check
          %p443 = pneg %p278
        $region38: #{tpu_custom_call.1} parent=11 // pred_check_branch
          %445 = sbr.rel (%p443) target = $region40
        $region39: #{tpu_custom_call.1} parent=11 // pred_region
          _
        $region40: #{tpu_custom_call.1} parent=11 // pred_fallthru
          _
        // Predicated region
        $region41: #{tpu_custom_call.1} parent=11 // pred_check
          %p446 = pneg %p299
        $region42: #{tpu_custom_call.1} parent=11 // pred_check_branch
          %448 = sbr.rel (%p446) target = $region44
        $region43: #{tpu_custom_call.1} parent=11 // pred_region
          %450 = vsyncadd [#allocation6], 0
          %s451 = sshll.u32 %s11, 4
          %s452 = int_to_ptr.hbm [resolvable:$true] %s451
          %s453 = sshll.u32 [#allocation7], 4
          %s454 = int_to_ptr.vmem [resolvable:$true] %s453
          %459 = dma.hbm_to_vmem [thread:$0]  %s452, 2048, %s454, [#allocation6], 128, 128, 8
        $region44: #{tpu_custom_call.1} parent=11 // pred_fallthru
          _
        // Predicated region
        $region45: #{tpu_custom_call.1} parent=11 // pred_check
          %p460 = pneg %p320
        $region46: #{tpu_custom_call.1} parent=11 // pred_check_branch
          %462 = sbr.rel (%p460) target = $region48
        $region47: #{tpu_custom_call.1} parent=11 // pred_region
          _
        $region48: #{tpu_custom_call.1} parent=11 // pred_fallthru
          _
        // Predicated region
        $region49: #{tpu_custom_call.1} parent=11 // pred_check
          %p463 = pneg %p341
        $region50: #{tpu_custom_call.1} parent=11 // pred_check_branch
          %465 = sbr.rel (%p463) target = $region52
        $region51: #{tpu_custom_call.1} parent=11 // pred_region
          %467 = vsyncadd [#allocation9], 0
          %s468 = sshll.u32 %s13, 4
          %s469 = int_to_ptr.hbm [resolvable:$true] %s468
          %s470 = sshll.u32 [#allocation8], 4
          %s471 = int_to_ptr.vmem [resolvable:$true] %s470
          %476 = dma.hbm_to_vmem [thread:$0]  %s469, 2048, %s471, [#allocation9], 128, 128, 8
        $region52: #{tpu_custom_call.1} parent=11 // pred_fallthru
          _
        // Predicated region
        $region53: #{tpu_custom_call.1} parent=11 // pred_check
          %p477 = pneg %p362
        $region54: #{tpu_custom_call.1} parent=11 // pred_check_branch
          %479 = sbr.rel (%p477) target = $region56
        $region55: #{tpu_custom_call.1} parent=11 // pred_region
          _
        $region56: #{tpu_custom_call.1} parent=11 // pred_fallthru
          _
      $region12: #{tpu_custom_call.1} parent=5 // pred_fallthru
        _
      %p480 = scmp.lt.s32.totalorder %s27, 4
      // Predicated region
      $region57: #{tpu_custom_call.1} parent=5 // pred_check
        %p481 = pneg %p480
      $region58: #{tpu_custom_call.1} parent=5 // pred_check_branch
        %483 = sbr.rel (%p481) target = $region60
      $region59: #{tpu_custom_call.1} parent=5 // pred_region
        // Predicated region
        $region61: #{tpu_custom_call.1} parent=59 // pred_check
          %p484 = pneg %p47
        $region62: #{tpu_custom_call.1} parent=59 // pred_check_branch
          %486 = sbr.rel (%p484) target = $region64
        $region63: #{tpu_custom_call.1} parent=59 // pred_region
          %s487 = smul.u32 2, %s27
          %p488 = scmp.lt.s32.totalorder %s487, 7
          %s489 = scalar_select %p488, %s487, 7
          %s490 = smul.addr %s489, 8
          %s491 = scalar_lea.vmem %s0, %s490
          %s492 = smul.u32 2, %s27
        $region64: #{tpu_custom_call.1} parent=59 // pred_fallthru
          _
        // Predicated region
        $region65: #{tpu_custom_call.1} parent=59 // pred_check
          %p493 = pneg %p73
        $region66: #{tpu_custom_call.1} parent=59 // pred_check_branch
          %495 = sbr.rel (%p493) target = $region68
        $region67: #{tpu_custom_call.1} parent=59 // pred_region
          %s496 = smul.u32 2, %s27
          %p497 = scmp.lt.s32.totalorder %s496, 7
          %s498 = scalar_select %p497, %s496, 7
          %s499 = smul.addr %s498, 8
          %s500 = scalar_lea.vmem %s1, %s499
          %s501 = smul.u32 2, %s27
        $region68: #{tpu_custom_call.1} parent=59 // pred_fallthru
          _
        // Predicated region
        $region69: #{tpu_custom_call.1} parent=59 // pred_check
          %p502 = pneg %p99
        $region70: #{tpu_custom_call.1} parent=59 // pred_check_branch
          %504 = sbr.rel (%p502) target = $region72
        $region71: #{tpu_custom_call.1} parent=59 // pred_region
          %s505 = smul.u32 2, %s27
          %p506 = scmp.lt.s32.totalorder %s505, 7
          %s507 = scalar_select %p506, %s505, 7
          %s508 = smul.addr %s507, 8
          %s509 = scalar_lea.vmem %s2, %s508
          %s510 = smul.u32 2, %s27
        $region72: #{tpu_custom_call.1} parent=59 // pred_fallthru
          _
        // Predicated region
        $region73: #{tpu_custom_call.1} parent=59 // pred_check
          %p511 = pneg %p125
        $region74: #{tpu_custom_call.1} parent=59 // pred_check_branch
          %513 = sbr.rel (%p511) target = $region76
        $region75: #{tpu_custom_call.1} parent=59 // pred_region
          %s514 = smul.u32 2, %s27
          %p515 = scmp.lt.s32.totalorder %s514, 7
          %s516 = scalar_select %p515, %s514, 7
          %s517 = smul.addr %s516, 8
          %s518 = scalar_lea.vmem %s3, %s517
          %s519 = smul.u32 2, %s27
        $region76: #{tpu_custom_call.1} parent=59 // pred_fallthru
          _
      $region60: #{tpu_custom_call.1} parent=5 // pred_fallthru
        _
      %p520 = scmp.le.s32.totalorder 1, %s27
      %p521 = scmp.lt.s32.totalorder %s27, 5
      %p522 = pnand %p520, %p521
      %p523 = pneg %p522
      // Predicated region
      $region77: #{tpu_custom_call.1} parent=5 // pred_check
        _
      $region78: #{tpu_custom_call.1} parent=5 // pred_check_branch
        %525 = sbr.rel (%p522) target = $region80
      $region79: #{tpu_custom_call.1} parent=5 // pred_region
        %s526 = ssub.s32 %s27, 1
        // Predicated region
        $region81: #{tpu_custom_call.1} parent=79 // pred_check
          %p527 = pneg %p194
        $region82: #{tpu_custom_call.1} parent=79 // pred_check_branch
          %529 = sbr.rel (%p527) target = $region84
        $region83: #{tpu_custom_call.1} parent=79 // pred_region
          %531 = dma.done [#allocation3], 2048
        $region84: #{tpu_custom_call.1} parent=79 // pred_fallthru
          _
        // Predicated region
        $region85: #{tpu_custom_call.1} parent=79 // pred_check
          %p532 = pneg %p236
        $region86: #{tpu_custom_call.1} parent=79 // pred_check_branch
          %534 = sbr.rel (%p532) target = $region88
        $region87: #{tpu_custom_call.1} parent=79 // pred_region
          %536 = dma.done [#allocation6], 2048
        $region88: #{tpu_custom_call.1} parent=79 // pred_fallthru
          _
        // Predicated region
        $region89: #{tpu_custom_call.1} parent=79 // pred_check
          %p537 = pneg %p299
        $region90: #{tpu_custom_call.1} parent=79 // pred_check_branch
          %539 = sbr.rel (%p537) target = $region92
        $region91: #{tpu_custom_call.1} parent=79 // pred_region
          %541 = dma.done [#allocation6], 2048
        $region92: #{tpu_custom_call.1} parent=79 // pred_fallthru
          _
        // Predicated region
        $region93: #{tpu_custom_call.1} parent=79 // pred_check
          %p542 = pneg %p341
        $region94: #{tpu_custom_call.1} parent=79 // pred_check_branch
          %544 = sbr.rel (%p542) target = $region96
        $region95: #{tpu_custom_call.1} parent=79 // pred_region
          %546 = dma.done [#allocation9], 2048
        $region96: #{tpu_custom_call.1} parent=79 // pred_fallthru
          _
        %s547 = smul.u32 2, %s32
        %p548 = scmp.lt.s32.totalorder %s547, 7
        %s549 = scalar_select %p548, %s547, 7
        %s550 = smul.addr %s549, 8
        %s551 = scalar_lea.vmem %s0, %s550
        %p552 = pneg %p53
        %p553 = pneg %p50
        %s554 = smul.u32 2, %s32
        %p555 = scmp.lt.s32.totalorder %s554, 7
        %s556 = scalar_select %p555, %s554, 7
        %s557 = smul.addr %s556, 8
        %s558 = scalar_lea.vmem %s1, %s557
        %p559 = pneg %p79
        %p560 = pneg %p76
        %s561 = smul.u32 2, %s32
        %p562 = scmp.lt.s32.totalorder %s561, 7
        %s563 = scalar_select %p562, %s561, 7
        %s564 = smul.addr %s563, 8
        %s565 = scalar_lea.vmem %s2, %s564
        %p566 = pneg %p105
        %p567 = pneg %p102
        %s568 = smul.u32 2, %s32
        %p569 = scmp.lt.s32.totalorder %s568, 7
        %s570 = scalar_select %p569, %s568, 7
        %s571 = smul.addr %s570, 8
        %s572 = scalar_lea.vmem %s3, %s571
        %p573 = pneg %p131
        %p574 = pneg %p128
        %p575 = pneg %p152
        %p576 = pneg %p149
        %p577 = pneg %p173
        %p578 = pneg %p170
        %p579 = pneg %p194
        %p580 = pneg %p191
        %p581 = pneg %p215
        %p582 = pneg %p212
        %p583 = pneg %p236
        %p584 = pneg %p233
        %p585 = pneg %p257
        %p586 = pneg %p254
        %p587 = pneg %p278
        %p588 = pneg %p275
        %p589 = pneg %p299
        %p590 = pneg %p296
        %p591 = pneg %p320
        %p592 = pneg %p317
        %p593 = pneg %p341
        %p594 = pneg %p338
        %p595 = pneg %p362
        %p596 = pneg %p359
        %p597 = pneg %p388
        %p598 = pneg %p385
        %s599 = sand.u32 %s375, 1
        %s600 = scalar_lea.sflag [#allocation4], %s599
        %s601 = sand.u32 %s375, 1
        %s602 = smul.addr %s601, 16
        %s603 = scalar_lea.vmem [#allocation10], %s602
        %s604 = smul.u32 2, %s32
        %p605 = scmp.lt.s32.totalorder %s604, 7
        %s606 = scalar_select %p605, %s604, 7
        %s607 = smul.addr %s606, 8
        %s608 = scalar_lea.vmem %s0, %s607
        %s609 = smul.u32 2, %s32
        %s610 = smul.u32 2, %s32
        %p611 = scmp.lt.s32.totalorder %s610, 7
        %s612 = scalar_select %p611, %s610, 7
        %s613 = smul.addr %s612, 8
        %s614 = scalar_lea.vmem %s1, %s613
        %s615 = smul.u32 2, %s32
        %s616 = smul.u32 2, %s32
        %p617 = scmp.lt.s32.totalorder %s616, 7
        %s618 = scalar_select %p617, %s616, 7
        %s619 = smul.addr %s618, 8
        %s620 = scalar_lea.vmem %s2, %s619
        %s621 = smul.u32 2, %s32
        %s622 = smul.u32 2, %s32
        %p623 = scmp.lt.s32.totalorder %s622, 7
        %s624 = scalar_select %p623, %s622, 7
        %s625 = smul.addr %s624, 8
        %s626 = scalar_lea.vmem %s3, %s625
        %s627 = smul.u32 2, %s32
        %s628 = smul.u32 2, %s32
        %v629 = vld [vmem:[%s608] sm:$0xff]
        %v630 = vld [vmem:[%s608 + $0x8] sm:$0xff]
        %v631 = vld [vmem:[%s4] sm:$0xff]
        %v632 = vld [vmem:[%s4 + $0x8] sm:$0xff]
        %v633 = vld [vmem:[%s5] sm:$0x1]
        %v635 = vperm.slane %v633, 0
        %vm637 = vcmask 130048
        %v639 = vsel %vm637, %v629, 0
        %v642 = vsel %vm637, %v630, 0
        %644 = vmatpush.msra.mxu0 0.0
        %645 = vmatpush.msra.mxu0 0.0
        %646 = vmatpush.msra.mxu0 0.0
        %647 = vmatpush.msra.mxu0 0.0
        %648 = vmatpush.msra.mxu0 0.0
        %649 = vmatpush.msra.mxu0 0.0
        %650 = vmatpush.msra.mxu0 0.0
        %651 = vmatpush.msra.mxu0 0.0
        %652 = vmatpush.msra.mxu0 0.0
        %653 = vmatpush.msra.mxu0 0.0
        %654 = vmatpush.msra.mxu0 0.0
        %655 = vmatpush.msra.mxu0 0.0
        %656 = vmatpush.msra.mxu0 0.0
        %657 = vmatpush.msra.mxu0 0.0
        %658 = vmatpush.msra.mxu0 %v632
        %659 = vmatpush.msra.mxu0 %v631
        %660 = vmatmul.f32.gmra.mxu0 %v639
        %v661 = vpop.f32.mrf.mxu0
        %v662 = vadd.f32 %v635, %v661
        %663 = vmatmul.f32.gmra.mxu0 %v642
        %v664 = vpop.f32.mrf.mxu0
        %v665 = vadd.f32 %v635, %v664
        %666 = vdwg.mxu0
        %v667 = vmax.f32 %v662, 0.0
        %v668 = vmax.f32 %v665, 0.0
        %v669 = vld [vmem:[#allocation2] sm:$0xff]
        %v670 = vld [vmem:[#allocation2 + $0x8] sm:$0xff]
        %v671 = vld [vmem:[#allocation2 + $0x10] sm:$0xff]
        %v672 = vld [vmem:[#allocation2 + $0x18] sm:$0xff]
        %v673 = vld [vmem:[#allocation2 + $0x20] sm:$0xff]
        %v674 = vld [vmem:[#allocation2 + $0x28] sm:$0xff]
        %v675 = vld [vmem:[#allocation2 + $0x30] sm:$0xff]
        %v676 = vld [vmem:[#allocation2 + $0x38] sm:$0xff]
        %v677 = vld [vmem:[#allocation2 + $0x40] sm:$0xff]
        %v678 = vld [vmem:[#allocation2 + $0x48] sm:$0xff]
        %v679 = vld [vmem:[#allocation2 + $0x50] sm:$0xff]
        %v680 = vld [vmem:[#allocation2 + $0x58] sm:$0xff]
        %v681 = vld [vmem:[#allocation2 + $0x60] sm:$0xff]
        %v682 = vld [vmem:[#allocation2 + $0x68] sm:$0xff]
        %v683 = vld [vmem:[#allocation2 + $0x70] sm:$0xff]
        %v684 = vld [vmem:[#allocation2 + $0x78] sm:$0xff]
        %v685 = vld [vmem:[%s7] sm:$0x1]
        %v687 = vperm.slane %v685, 0
        %689 = vmatpush.msra.mxu0 %v684
        %690 = vmatpush.msra.mxu0 %v683
        %691 = vmatpush.msra.mxu0 %v682
        %692 = vmatpush.msra.mxu0 %v681
        %693 = vmatpush.msra.mxu0 %v680
        %694 = vmatpush.msra.mxu0 %v679
        %695 = vmatpush.msra.mxu0 %v678
        %696 = vmatpush.msra.mxu0 %v677
        %697 = vmatpush.msra.mxu0 %v676
        %698 = vmatpush.msra.mxu0 %v675
        %699 = vmatpush.msra.mxu0 %v674
        %700 = vmatpush.msra.mxu0 %v673
        %701 = vmatpush.msra.mxu0 %v672
        %702 = vmatpush.msra.mxu0 %v671
        %703 = vmatpush.msra.mxu0 %v670
        %704 = vmatpush.msra.mxu0 %v669
        %705 = vmatmul.f32.gmra.mxu0 %v667
        %v706 = vpop.f32.mrf.mxu0
        %v707 = vadd.f32 %v687, %v706
        %708 = vmatmul.f32.gmra.mxu0 %v668
        %v709 = vpop.f32.mrf.mxu0
        %v710 = vadd.f32 %v687, %v709
        %711 = vdwg.mxu0
        %v712 = vmax.f32 %v707, 0.0
        %v713 = vmax.f32 %v710, 0.0
        %v714 = vld [vmem:[%s614] sm:$0xff]
        %v715 = vld [vmem:[%s614 + $0x8] sm:$0xff]
        %v716 = vld [vmem:[%s620] sm:$0xff]
        %v717 = vld [vmem:[%s620 + $0x8] sm:$0xff]
        %v718 = vld [vmem:[%s626] sm:$0xff]
        %v719 = vld [vmem:[%s626 + $0x8] sm:$0xff]
        %722 = vrot.lane.b32.xlu0 %v716, 32
        %v723 = vpop.permute.xlu0 %722
        %724 = vrot.lane.b32.xlu0 %v717, 32
        %v725 = vpop.permute.xlu0 %724
        %728 = vrot.lane.b32.xlu0 %v716, 64
        %v729 = vpop.permute.xlu0 %728
        %730 = vrot.lane.b32.xlu0 %v717, 64
        %v731 = vpop.permute.xlu0 %730
        %736 = vrot.lane.b32.xlu0 %v718, 96
        %v737 = vpop.permute.xlu0 %736
        %738 = vrot.lane.b32.xlu0 %v719, 96
        %v739 = vpop.permute.xlu0 %738
        %742 = vrot.lane.b32.xlu0 %v718, 32
        %v743 = vpop.permute.xlu0 %742
        %744 = vrot.lane.b32.xlu0 %v719, 32
        %v745 = vpop.permute.xlu0 %744
        %vm748 = vcmask 261120
        %v749 = vsel %vm748, %v714, %v723
        %v750 = vsel %vm748, %v715, %v725
        %vm751 = vcmask 523264
        %v752 = vsel %vm751, %v749, %v729
        %v753 = vsel %vm751, %v750, %v731
        %vm754 = vcmask 785408
        %v755 = vsel %vm754, %v752, %v737
        %v756 = vsel %vm754, %v753, %v739
        %v757 = vsel %vm748, %v718, %v743
        %v758 = vsel %vm748, %v719, %v745
        %v759 = vsel %vm751, %v757, 0.0
        %v760 = vsel %vm751, %v758, 0.0
        %763 = vrot.lane.b32.xlu0 %v712, 32
        %v764 = vpop.permute.xlu0 %763
        %765 = vrot.lane.b32.xlu0 %v713, 32
        %v766 = vpop.permute.xlu0 %765
        %771 = vrot.lane.b32.xlu0 %v714, 64
        %v772 = vpop.permute.xlu0 %771
        %773 = vrot.lane.b32.xlu0 %v715, 64
        %v774 = vpop.permute.xlu0 %773
        %777 = vrot.lane.b32.xlu0 %v712, 96
        %v778 = vpop.permute.xlu0 %777
        %779 = vrot.lane.b32.xlu0 %v713, 96
        %v780 = vpop.permute.xlu0 %779
        %v783 = vsel %vm748, %v712, %v764
        %v784 = vsel %vm748, %v713, %v766
        %v785 = vsel %vm751, %v783, %v772
        %v786 = vsel %vm751, %v784, %v774
        %v787 = vsel %vm754, %v785, %v778
        %v788 = vsel %vm754, %v786, %v780
        %v789 = vsel %vm751, %v749, 0.0
        %v790 = vsel %vm751, %v750, 0.0
        %v791 = vmul.f32 %v755, %v787
        %v792 = vmul.f32 %v759, %v789
        %v793 = vmul.f32 %v756, %v788
        %v794 = vmul.f32 %v760, %v790
        %v795 = vld [vmem:[%s9] sm:$0xff]
        %v796 = vld [vmem:[%s9 + $0x8] sm:$0xff]
        %v797 = vld [vmem:[%s9 + $0x10] sm:$0xff]
        %v798 = vld [vmem:[%s9 + $0x18] sm:$0xff]
        %v799 = vld [vmem:[%s9 + $0x20] sm:$0xff]
        %v800 = vld [vmem:[%s9 + $0x28] sm:$0xff]
        %v801 = vld [vmem:[%s9 + $0x30] sm:$0xff]
        %v802 = vld [vmem:[%s9 + $0x38] sm:$0xff]
        %v803 = vld [vmem:[%s9 + $0x40] sm:$0xff]
        %v804 = vld [vmem:[%s9 + $0x48] sm:$0xff]
        %v805 = vld [vmem:[%s9 + $0x50] sm:$0xff]
        %v806 = vld [vmem:[%s9 + $0x58] sm:$0xff]
        %v807 = vld [vmem:[%s9 + $0x60] sm:$0xff]
        %v808 = vld [vmem:[%s9 + $0x68] sm:$0xff]
        %v809 = vld [vmem:[%s9 + $0x70] sm:$0xff]
        %v810 = vld [vmem:[%s9 + $0x78] sm:$0xff]
        %v811 = vld [vmem:[%s9 + $0x80] sm:$0xff]
        %v812 = vld [vmem:[%s9 + $0x88] sm:$0xff]
        %v813 = vld [vmem:[%s9 + $0x90] sm:$0xff]
        %v814 = vld [vmem:[%s9 + $0x98] sm:$0xff]
        %v815 = vld [vmem:[%s9 + $0xa0] sm:$0xff]
        %v816 = vld [vmem:[%s9 + $0xa8] sm:$0xff]
        %v817 = vld [vmem:[%s9 + $0xb0] sm:$0xff]
        %v818 = vld [vmem:[%s9 + $0xb8] sm:$0xff]
        %v819 = vld [vmem:[%s9 + $0xc0] sm:$0xff]
        %v820 = vld [vmem:[%s9 + $0xc8] sm:$0xff]
        %v821 = vld [vmem:[%s9 + $0xd0] sm:$0xff]
        %v822 = vld [vmem:[%s9 + $0xd8] sm:$0xff]
        %v823 = vld [vmem:[%s9 + $0xe0] sm:$0xff]
        %v824 = vld [vmem:[%s9 + $0xe8] sm:$0xff]
        %v825 = vld [vmem:[%s9 + $0xf0] sm:$0xff]
        %v826 = vld [vmem:[%s9 + $0xf8] sm:$0xff]
        %827 = vmatpush.msra.mxu0 %v810
        %828 = vmatpush.msra.mxu0 %v809
        %829 = vmatpush.msra.mxu0 %v808
        %830 = vmatpush.msra.mxu0 %v807
        %831 = vmatpush.msra.mxu0 %v806
        %832 = vmatpush.msra.mxu0 %v805
        %833 = vmatpush.msra.mxu0 %v804
        %834 = vmatpush.msra.mxu0 %v803
        %835 = vmatpush.msra.mxu0 %v802
        %836 = vmatpush.msra.mxu0 %v801
        %837 = vmatpush.msra.mxu0 %v800
        %838 = vmatpush.msra.mxu0 %v799
        %839 = vmatpush.msra.mxu0 %v798
        %840 = vmatpush.msra.mxu0 %v797
        %841 = vmatpush.msra.mxu0 %v796
        %842 = vmatpush.msra.mxu0 %v795
        %843 = vmatmul.f32.gmra.mxu0 %v791
        %v844 = vpop.f32.mrf.mxu0
        %v845 = vadd.f32 0.0, %v844
        %846 = vmatmul.f32.gmra.mxu0 %v793
        %v847 = vpop.f32.mrf.mxu0
        %v848 = vadd.f32 0.0, %v847
        %849 = vdwg.mxu0
        %850 = vmatpush.msra.mxu0 %v826
        %851 = vmatpush.msra.mxu0 %v825
        %852 = vmatpush.msra.mxu0 %v824
        %853 = vmatpush.msra.mxu0 %v823
        %854 = vmatpush.msra.mxu0 %v822
        %855 = vmatpush.msra.mxu0 %v821
        %856 = vmatpush.msra.mxu0 %v820
        %857 = vmatpush.msra.mxu0 %v819
        %858 = vmatpush.msra.mxu0 %v818
        %859 = vmatpush.msra.mxu0 %v817
        %860 = vmatpush.msra.mxu0 %v816
        %861 = vmatpush.msra.mxu0 %v815
        %862 = vmatpush.msra.mxu0 %v814
        %863 = vmatpush.msra.mxu0 %v813
        %864 = vmatpush.msra.mxu0 %v812
        %865 = vmatpush.msra.mxu0 %v811
        %866 = vmatmul.f32.gmra.mxu0 %v792
        %v867 = vpop.f32.mrf.mxu0
        %v868 = vadd.f32 %v845, %v867
        %869 = vmatmul.f32.gmra.mxu0 %v794
        %v870 = vpop.f32.mrf.mxu0
        %v871 = vadd.f32 %v848, %v870
        %872 = vdwg.mxu0
        %v873 = vld [vmem:[#allocation5] sm:$0xff]
        %v874 = vld [vmem:[#allocation5 + $0x8] sm:$0xff]
        %v875 = vld [vmem:[#allocation5 + $0x10] sm:$0xff]
        %v876 = vld [vmem:[#allocation5 + $0x18] sm:$0xff]
        %v877 = vld [vmem:[#allocation5 + $0x20] sm:$0xff]
        %v878 = vld [vmem:[#allocation5 + $0x28] sm:$0xff]
        %v879 = vld [vmem:[#allocation5 + $0x30] sm:$0xff]
        %v880 = vld [vmem:[#allocation5 + $0x38] sm:$0xff]
        %v881 = vld [vmem:[#allocation5 + $0x40] sm:$0xff]
        %v882 = vld [vmem:[#allocation5 + $0x48] sm:$0xff]
        %v883 = vld [vmem:[#allocation5 + $0x50] sm:$0xff]
        %v884 = vld [vmem:[#allocation5 + $0x58] sm:$0xff]
        %v885 = vld [vmem:[#allocation5 + $0x60] sm:$0xff]
        %v886 = vld [vmem:[#allocation5 + $0x68] sm:$0xff]
        %v887 = vld [vmem:[#allocation5 + $0x70] sm:$0xff]
        %v888 = vld [vmem:[#allocation5 + $0x78] sm:$0xff]
        %889 = vmatpush.msra.mxu0 %v888
        %890 = vmatpush.msra.mxu0 %v887
        %891 = vmatpush.msra.mxu0 %v886
        %892 = vmatpush.msra.mxu0 %v885
        %893 = vmatpush.msra.mxu0 %v884
        %894 = vmatpush.msra.mxu0 %v883
        %895 = vmatpush.msra.mxu0 %v882
        %896 = vmatpush.msra.mxu0 %v881
        %897 = vmatpush.msra.mxu0 %v880
        %898 = vmatpush.msra.mxu0 %v879
        %899 = vmatpush.msra.mxu0 %v878
        %900 = vmatpush.msra.mxu0 %v877
        %901 = vmatpush.msra.mxu0 %v876
        %902 = vmatpush.msra.mxu0 %v875
        %903 = vmatpush.msra.mxu0 %v874
        %904 = vmatpush.msra.mxu0 %v873
        %905 = vmatmul.f32.gmra.mxu0 %v712
        %v906 = vpop.f32.mrf.mxu0
        %v907 = vadd.f32 %v868, %v906
        %908 = vmatmul.f32.gmra.mxu0 %v713
        %v909 = vpop.f32.mrf.mxu0
        %v910 = vadd.f32 %v871, %v909
        %911 = vdwg.mxu0
        %v912 = vld [vmem:[%s10] sm:$0x1]
        %v914 = vperm.slane %v912, 0
        %v916 = vadd.f32 %v907, %v914
        %v917 = vadd.f32 %v910, %v914
        %v918 = vmax.f32 %v916, 0.0
        %v919 = vmax.f32 %v917, 0.0
        %v920 = vld [vmem:[#allocation7] sm:$0xff]
        %v921 = vld [vmem:[#allocation7 + $0x8] sm:$0xff]
        %v922 = vld [vmem:[#allocation7 + $0x10] sm:$0xff]
        %v923 = vld [vmem:[#allocation7 + $0x18] sm:$0xff]
        %v924 = vld [vmem:[#allocation7 + $0x20] sm:$0xff]
        %v925 = vld [vmem:[#allocation7 + $0x28] sm:$0xff]
        %v926 = vld [vmem:[#allocation7 + $0x30] sm:$0xff]
        %v927 = vld [vmem:[#allocation7 + $0x38] sm:$0xff]
        %v928 = vld [vmem:[#allocation7 + $0x40] sm:$0xff]
        %v929 = vld [vmem:[#allocation7 + $0x48] sm:$0xff]
        %v930 = vld [vmem:[#allocation7 + $0x50] sm:$0xff]
        %v931 = vld [vmem:[#allocation7 + $0x58] sm:$0xff]
        %v932 = vld [vmem:[#allocation7 + $0x60] sm:$0xff]
        %v933 = vld [vmem:[#allocation7 + $0x68] sm:$0xff]
        %v934 = vld [vmem:[#allocation7 + $0x70] sm:$0xff]
        %v935 = vld [vmem:[#allocation7 + $0x78] sm:$0xff]
        %v936 = vld [vmem:[%s12] sm:$0x1]
        %v938 = vperm.slane %v936, 0
        %940 = vmatpush.msra.mxu0 %v935
        %941 = vmatpush.msra.mxu0 %v934
        %942 = vmatpush.msra.mxu0 %v933
        %943 = vmatpush.msra.mxu0 %v932
        %944 = vmatpush.msra.mxu0 %v931
        %945 = vmatpush.msra.mxu0 %v930
        %946 = vmatpush.msra.mxu0 %v929
        %947 = vmatpush.msra.mxu0 %v928
        %948 = vmatpush.msra.mxu0 %v927
        %949 = vmatpush.msra.mxu0 %v926
        %950 = vmatpush.msra.mxu0 %v925
        %951 = vmatpush.msra.mxu0 %v924
        %952 = vmatpush.msra.mxu0 %v923
        %953 = vmatpush.msra.mxu0 %v922
        %954 = vmatpush.msra.mxu0 %v921
        %955 = vmatpush.msra.mxu0 %v920
        %956 = vmatmul.f32.gmra.mxu0 %v918
        %v957 = vpop.f32.mrf.mxu0
        %v958 = vadd.f32 %v938, %v957
        %959 = vmatmul.f32.gmra.mxu0 %v919
        %v960 = vpop.f32.mrf.mxu0
        %v961 = vadd.f32 %v938, %v960
        %962 = vdwg.mxu0
        %v963 = vmax.f32 %v958, 0.0
        %v964 = vmax.f32 %v961, 0.0
        %v965 = vld [vmem:[#allocation8] sm:$0xff]
        %v966 = vld [vmem:[#allocation8 + $0x8] sm:$0xff]
        %v967 = vld [vmem:[#allocation8 + $0x10] sm:$0xff]
        %v968 = vld [vmem:[#allocation8 + $0x18] sm:$0xff]
        %v969 = vld [vmem:[#allocation8 + $0x20] sm:$0xff]
        %v970 = vld [vmem:[#allocation8 + $0x28] sm:$0xff]
        %v971 = vld [vmem:[#allocation8 + $0x30] sm:$0xff]
        %v972 = vld [vmem:[#allocation8 + $0x38] sm:$0xff]
        %v973 = vld [vmem:[#allocation8 + $0x40] sm:$0xff]
        %v974 = vld [vmem:[#allocation8 + $0x48] sm:$0xff]
        %v975 = vld [vmem:[#allocation8 + $0x50] sm:$0xff]
        %v976 = vld [vmem:[#allocation8 + $0x58] sm:$0xff]
        %v977 = vld [vmem:[#allocation8 + $0x60] sm:$0xff]
        %v978 = vld [vmem:[#allocation8 + $0x68] sm:$0xff]
        %v979 = vld [vmem:[#allocation8 + $0x70] sm:$0xff]
        %v980 = vld [vmem:[#allocation8 + $0x78] sm:$0xff]
        %v981 = vld [vmem:[%s14] sm:$0x1]
        %v983 = vperm.slane %v981, 0
        %985 = vmatpush.msra.mxu0 %v980
        %986 = vmatpush.msra.mxu0 %v979
        %987 = vmatpush.msra.mxu0 %v978
        %988 = vmatpush.msra.mxu0 %v977
        %989 = vmatpush.msra.mxu0 %v976
        %990 = vmatpush.msra.mxu0 %v975
        %991 = vmatpush.msra.mxu0 %v974
        %992 = vmatpush.msra.mxu0 %v973
        %993 = vmatpush.msra.mxu0 %v972
        %994 = vmatpush.msra.mxu0 %v971
        %995 = vmatpush.msra.mxu0 %v970
        %996 = vmatpush.msra.mxu0 %v969
        %997 = vmatpush.msra.mxu0 %v968
        %998 = vmatpush.msra.mxu0 %v967
        %999 = vmatpush.msra.mxu0 %v966
        %1000 = vmatpush.msra.mxu0 %v965
        %1001 = vmatmul.f32.gmra.mxu0 %v963
        %v1002 = vpop.f32.mrf.mxu0
        %v1003 = vadd.f32 %v983, %v1002
        %1004 = vmatmul.f32.gmra.mxu0 %v964
        %v1005 = vpop.f32.mrf.mxu0
        %v1006 = vadd.f32 %v983, %v1005
        %1007 = vdwg.mxu0
        %1008 = vst [vmem:[%s603] sm:$0xff] %v1003
        %1009 = vst [vmem:[%s603 + $0x8] sm:$0xff] %v1006
        %s1010 = sand.u32 %s375, 1
        %s1011 = scalar_lea.sflag [#allocation4], %s1010
        %s1012 = sand.u32 %s375, 1
        %s1013 = smul.addr %s1012, 16
        %s1014 = scalar_lea.vmem [#allocation10], %s1013
        // Predicated region
        $region97: #{tpu_custom_call.1} parent=79 // pred_check
          %p1015 = pneg %p385
        $region98: #{tpu_custom_call.1} parent=79 // pred_check_branch
          %1017 = sbr.rel (%p1015) target = $region100
        $region99: #{tpu_custom_call.1} parent=79 // pred_region
          %s1018 = smul.u32 2, %s32
          %1020 = vsyncadd %s1011, 0
          %s1021 = smul.addr %s1018, 8
          %s1022 = scalar_lea.hbm %s15, %s1021
          %s1023 = sshll.u32 %s1014, 4
          %s1024 = int_to_ptr.vmem [resolvable:$true] %s1023
          %s1025 = sshll.u32 %s1022, 4
          %s1026 = int_to_ptr.hbm [resolvable:$true] %s1025
          %1031 = dma.vmem_to_hbm [thread:$0]  %s1024, 256, %s1026, %s1011, 128, 128, 8
        $region100: #{tpu_custom_call.1} parent=79 // pred_fallthru
          _
      $region80: #{tpu_custom_call.1} parent=5 // pred_fallthru
        _
      %p1032 = scmp.le.s32.totalorder 2, %s27
      // Predicated region
      $region101: #{tpu_custom_call.1} parent=5 // pred_check
        %p1033 = pneg %p1032
      $region102: #{tpu_custom_call.1} parent=5 // pred_check_branch
        %1035 = sbr.rel (%p1033) target = $region104
      $region103: #{tpu_custom_call.1} parent=5 // pred_region
        %s1036 = ssub.s32 %s27, 2
        // Predicated region
        $region105: #{tpu_custom_call.1} parent=103 // pred_check
          %p1037 = pneg %p391
        $region106: #{tpu_custom_call.1} parent=103 // pred_check_branch
          %1039 = sbr.rel (%p1037) target = $region108
        $region107: #{tpu_custom_call.1} parent=103 // pred_region
          %s1040 = sand.u32 %s376, 1
          %s1041 = scalar_lea.sflag [#allocation4], %s1040
          %s1042 = sand.u32 %s376, 1
          %s1043 = smul.addr %s1042, 16
          %s1044 = scalar_lea.vmem [#allocation10], %s1043
          %1046 = dma.done %s1041, 256
        $region108: #{tpu_custom_call.1} parent=103 // pred_fallthru
          _
      $region104: #{tpu_custom_call.1} parent=5 // pred_fallthru
        _
    $region6: #{tpu_custom_call.1} parent=1 // loop_footer
      %s31 = sadd.s32 1, %s27
    $region7: #{tpu_custom_call.1} parent=1 // loop_footer_branch
      %26 = sbr.rel target = $region3
    $region8: #{tpu_custom_call.1} parent=1 // loop_exit
      _
    %1047 = vsyncpa [#allocation3], 1
    %s1048 = scalar_lea.sflag [#allocation3], 1
    %1049 = vsyncpa %s1048, 1
    %1050 = vsyncpa [#allocation6], 1
    %1051 = vsyncpa [#allocation9], 1
    %1052 = vsyncpa [#allocation4], 1
    %s1053 = scalar_lea.sflag [#allocation4], 1
    %1054 = vsyncpa %s1053, 1

// kernel: tpu_custom_call.1
$region0: #{tpu_custom_call.1}
  #allocation0 [shape = 'u32[]', space=smem, size = 0x4, offset = 0x4, fixed_abs, tag = 'smem constant byte address 0x4 - core index']
  #allocation1 [shape = 'u32[72,128]{1,0:T(1,128)}', space=vmem, size = 0x9000, scoped, tag = 'internal scratch']
  %s0 = inlined_call_operand.vmem [shape: f32[64,16], index: 0, kind: input, shape index: {}]
  %s1 = inlined_call_operand.vmem [shape: f32[64,32], index: 1, kind: input, shape index: {}]
  %s2 = inlined_call_operand.vmem [shape: f32[64,32], index: 2, kind: input, shape index: {}]
  %s3 = inlined_call_operand.vmem [shape: f32[64,32], index: 3, kind: input, shape index: {}]
  %s4 = inlined_call_operand.vmem [shape: f32[16,128], index: 4, kind: input, shape index: {}]
  %s5 = inlined_call_operand.vmem [shape: f32[1,128], index: 5, kind: input, shape index: {}]
  %s6 = inlined_call_operand.hbm [shape: f32[128,128], index: 6, kind: input, shape index: {}]
  %s7 = inlined_call_operand.vmem [shape: f32[1,128], index: 7, kind: input, shape index: {}]
  %s8 = inlined_call_operand.hbm [shape: f32[128,128], index: 8, kind: input, shape index: {}]
  %s9 = inlined_call_operand.vmem [shape: f32[256,128], index: 9, kind: input, shape index: {}]
  %s10 = inlined_call_operand.vmem [shape: f32[1,128], index: 10, kind: input, shape index: {}]
  %s11 = inlined_call_operand.hbm [shape: f32[128,128], index: 11, kind: input, shape index: {}]
  %s12 = inlined_call_operand.vmem [shape: f32[1,128], index: 12, kind: input, shape index: {}]
  %s13 = inlined_call_operand.hbm [shape: f32[128,128], index: 13, kind: input, shape index: {}]
  %s14 = inlined_call_operand.vmem [shape: f32[1,128], index: 14, kind: input, shape index: {}]
  %s15 = inlined_call_operand.hbm [shape: f32[64,128], index: 15, kind: output, shape index: {}]
  %s16 = sld [smem:[#allocation0]]
  $region109: #{tpu_custom_call.1} parent=0
    _
  %s18 = ssub.s32 1, %s16
  %s19 = scalar_select 0, %s18, %s16
  $region1: #{tpu_custom_call.1} parent=0
    #allocation2 [shape = 'u8[65536]{0}', space=vmem, size = 0x10000, scoped, tag = 'input window, operand 6, single buffered']
    #allocation3 [shape = 's32[2]{0}', space=sflag, size = 0x8, scoped, tag = 'scoped memory for tpu_custom_call.1']
    #allocation4 [shape = 's32[2]{0}', space=sflag, size = 0x8, scoped, tag = 'scoped memory for tpu_custom_call.1']
    #allocation5 [shape = 'u8[65536]{0}', space=vmem, size = 0x10000, scoped, tag = 'input window, operand 8, single buffered']
    #allocation6 [shape = 's32[1]{0}', space=sflag, size = 0x4, scoped, tag = 'scoped memory for tpu_custom_call.1']
    #allocation7 [shape = 'u8[65536]{0}', space=vmem, size = 0x10000, scoped, tag = 'input window, operand 11, single buffered']
    #allocation8 [shape = 'u8[65536]{0}', space=vmem, size = 0x10000, scoped, tag = 'input window, operand 13, single buffered']
    #allocation9 [shape = 's32[1]{0}', space=sflag, size = 0x4, scoped, tag = 'scoped memory for tpu_custom_call.1']
    #allocation10 [shape = 'u8[16384]{0}', space=vmem, size = 0x4000, scoped, tag = 'output window, operand 0']
    %20 = vsyncpa [#allocation3], 0
    %21 = vsyncpa [#allocation6], 0
    %22 = vsyncpa [#allocation9], 0
    %23 = vsyncpa [#allocation4], 0
    %s24 = scalar_lea.sflag [#allocation4], 1
    %25 = vsyncpa %s24, 0
    loop: start=0, step=1, limit=6
    $region2: #{tpu_custom_call.1} parent=1 // loop_pre_header
      _
    $region3: #{tpu_custom_call.1} parent=1 // loop_header
      %s27 = sphi 0, %s31
      %p28 = scmp.ge.s32.totalorder %s27, 6
      %s37 = sphi 0, %s39
      %s40 = sphi 0, %s37
      %s41 = sphi 0, %s40
      %s57 = sphi 0, %s41
      %s63 = sphi 0, %s65
      %s66 = sphi 0, %s63
      %s67 = sphi 0, %s66
      %s83 = sphi 0, %s67
      %s89 = sphi 0, %s91
      %s92 = sphi 0, %s89
      %s93 = sphi 0, %s92
      %s109 = sphi 0, %s93
      %s115 = sphi 0, %s117
      %s118 = sphi 0, %s115
      %s119 = sphi 0, %s118
      %s135 = sphi 0, %s119
      %s139 = sphi 0, %s139
      %s141 = sphi 0, %s139
      %s142 = sphi 0, %s141
      %s156 = sphi 0, %s142
      %s160 = sphi 0, %s160
      %s162 = sphi 0, %s160
      %s163 = sphi 0, %s162
      %s177 = sphi 0, %s163
      %s181 = sphi 0, %s181
      %s183 = sphi 0, %s181
      %s184 = sphi 0, %s183
      %s198 = sphi 0, %s184
      %s202 = sphi 0, %s202
      %s204 = sphi 0, %s202
      %s205 = sphi 0, %s204
      %s219 = sphi 0, %s205
      %s223 = sphi 0, %s223
      %s225 = sphi 0, %s223
      %s226 = sphi 0, %s225
      %s240 = sphi 0, %s226
      %s244 = sphi 0, %s244
      %s246 = sphi 0, %s244
      %s247 = sphi 0, %s246
      %s261 = sphi 0, %s247
      %s265 = sphi 0, %s265
      %s267 = sphi 0, %s265
      %s268 = sphi 0, %s267
      %s282 = sphi 0, %s268
      %s286 = sphi 0, %s286
      %s288 = sphi 0, %s286
      %s289 = sphi 0, %s288
      %s303 = sphi 0, %s289
      %s307 = sphi 0, %s307
      %s309 = sphi 0, %s307
      %s310 = sphi 0, %s309
      %s324 = sphi 0, %s310
      %s328 = sphi 0, %s328
      %s330 = sphi 0, %s328
      %s331 = sphi 0, %s330
      %s345 = sphi 0, %s331
      %s349 = sphi 0, %s349
      %s351 = sphi 0, %s349
      %s352 = sphi 0, %s351
      %s366 = sphi 0, %s352
      %s372 = sphi 0, %s374
      %s375 = sphi 0, %s372
      %s376 = sphi 0, %s375
      %s392 = sphi 0, %s376
    $region4: #{tpu_custom_call.1} parent=1 // loop_header_branch
      %30 = sbr.rel (%p28) target = $region8
    $region5: #{tpu_custom_call.1} parent=1 // loop_body
      %s32 = ssub.s32 %s27, 1
      %s33 = ssub.s32 %s27, 2
      %s34 = sadd.s32 %s27, 1
      %s35 = ssub.s32 %s27, %s34
      %p36 = scmp.eq.s32.totalorder %s35, 0
      %s38 = sadd.s32 %s37, 1
      %s39 = scalar_select %p36, %s37, %s38
      %p42 = pneg %p36
      %p43 = scmp.eq.s32.totalorder %s27, 3
      %p44 = por %p42, %p43
      %p45 = scmp.ne.s32.totalorder %s37, %s40
      %p46 = scmp.eq.s32.totalorder %s27, 0
      %p47 = por %p45, %p46
      %p48 = scmp.ne.s32.totalorder %s37, %s40
      %p49 = scmp.eq.s32.totalorder %s32, 3
      %p50 = por %p48, %p49
      %p51 = scmp.ne.s32.totalorder %s40, %s41
      %p52 = scmp.eq.s32.totalorder %s32, 0
      %p53 = por %p51, %p52
      %p54 = scmp.ne.s32.totalorder %s40, %s41
      %p55 = scmp.eq.s32.totalorder %s33, 3
      %p56 = por %p54, %p55
      %p58 = scmp.ne.s32.totalorder %s41, %s57
      %p59 = scmp.eq.s32.totalorder %s33, 0
      %p60 = por %p58, %p59
      %s61 = ssub.s32 %s27, %s34
      %p62 = scmp.eq.s32.totalorder %s61, 0
      %s64 = sadd.s32 %s63, 1
      %s65 = scalar_select %p62, %s63, %s64
      %p68 = pneg %p62
      %p69 = scmp.eq.s32.totalorder %s27, 3
      %p70 = por %p68, %p69
      %p71 = scmp.ne.s32.totalorder %s63, %s66
      %p72 = scmp.eq.s32.totalorder %s27, 0
      %p73 = por %p71, %p72
      %p74 = scmp.ne.s32.totalorder %s63, %s66
      %p75 = scmp.eq.s32.totalorder %s32, 3
      %p76 = por %p74, %p75
      %p77 = scmp.ne.s32.totalorder %s66, %s67
      %p78 = scmp.eq.s32.totalorder %s32, 0
      %p79 = por %p77, %p78
      %p80 = scmp.ne.s32.totalorder %s66, %s67
      %p81 = scmp.eq.s32.totalorder %s33, 3
      %p82 = por %p80, %p81
      %p84 = scmp.ne.s32.totalorder %s67, %s83
      %p85 = scmp.eq.s32.totalorder %s33, 0
      %p86 = por %p84, %p85
      %s87 = ssub.s32 %s27, %s34
      %p88 = scmp.eq.s32.totalorder %s87, 0
      %s90 = sadd.s32 %s89, 1
      %s91 = scalar_select %p88, %s89, %s90
      %p94 = pneg %p88
      %p95 = scmp.eq.s32.totalorder %s27, 3
      %p96 = por %p94, %p95
      %p97 = scmp.ne.s32.totalorder %s89, %s92
      %p98 = scmp.eq.s32.totalorder %s27, 0
      %p99 = por %p97, %p98
      %p100 = scmp.ne.s32.totalorder %s89, %s92
      %p101 = scmp.eq.s32.totalorder %s32, 3
      %p102 = por %p100, %p101
      %p103 = scmp.ne.s32.totalorder %s92, %s93
      %p104 = scmp.eq.s32.totalorder %s32, 0
      %p105 = por %p103, %p104
      %p106 = scmp.ne.s32.totalorder %s92, %s93
      %p107 = scmp.eq.s32.totalorder %s33, 3
      %p108 = por %p106, %p107
      %p110 = scmp.ne.s32.totalorder %s93, %s109
      %p111 = scmp.eq.s32.totalorder %s33, 0
      %p112 = por %p110, %p111
      %s113 = ssub.s32 %s27, %s34
      %p114 = scmp.eq.s32.totalorder %s113, 0
      %s116 = sadd.s32 %s115, 1
      %s117 = scalar_select %p114, %s115, %s116
      %p120 = pneg %p114
      %p121 = scmp.eq.s32.totalorder %s27, 3
      %p122 = por %p120, %p121
      %p123 = scmp.ne.s32.totalorder %s115, %s118
      %p124 = scmp.eq.s32.totalorder %s27, 0
      %p125 = por %p123, %p124
      %p126 = scmp.ne.s32.totalorder %s115, %s118
      %p127 = scmp.eq.s32.totalorder %s32, 3
      %p128 = por %p126, %p127
      %p129 = scmp.ne.s32.totalorder %s118, %s119
      %p130 = scmp.eq.s32.totalorder %s32, 0
      %p131 = por %p129, %p130
      %p132 = scmp.ne.s32.totalorder %s118, %s119
      %p133 = scmp.eq.s32.totalorder %s33, 3
      %p134 = por %p132, %p133
      %p136 = scmp.ne.s32.totalorder %s119, %s135
      %p137 = scmp.eq.s32.totalorder %s33, 0
      %p138 = por %p136, %p137
      %s140 = sadd.s32 %s139, 1
      %p143 = scmp.eq.s32.totalorder %s27, 3
      %p144 = scmp.ne.s32.totalorder %s139, %s141
      %p145 = scmp.eq.s32.totalorder %s27, 0
      %p146 = por %p144, %p145
      %p147 = scmp.ne.s32.totalorder %s139, %s141
      %p148 = scmp.eq.s32.totalorder %s32, 3
      %p149 = por %p147, %p148
      %p150 = scmp.ne.s32.totalorder %s141, %s142
      %p151 = scmp.eq.s32.totalorder %s32, 0
      %p152 = por %p150, %p151
      %p153 = scmp.ne.s32.totalorder %s141, %s142
      %p154 = scmp.eq.s32.totalorder %s33, 3
      %p155 = por %p153, %p154
      %p157 = scmp.ne.s32.totalorder %s142, %s156
      %p158 = scmp.eq.s32.totalorder %s33, 0
      %p159 = por %p157, %p158
      %s161 = sadd.s32 %s160, 1
      %p164 = scmp.eq.s32.totalorder %s27, 3
      %p165 = scmp.ne.s32.totalorder %s160, %s162
      %p166 = scmp.eq.s32.totalorder %s27, 0
      %p167 = por %p165, %p166
      %p168 = scmp.ne.s32.totalorder %s160, %s162
      %p169 = scmp.eq.s32.totalorder %s32, 3
      %p170 = por %p168, %p169
      %p171 = scmp.ne.s32.totalorder %s162, %s163
      %p172 = scmp.eq.s32.totalorder %s32, 0
      %p173 = por %p171, %p172
      %p174 = scmp.ne.s32.totalorder %s162, %s163
      %p175 = scmp.eq.s32.totalorder %s33, 3
      %p176 = por %p174, %p175
      %p178 = scmp.ne.s32.totalorder %s163, %s177
      %p179 = scmp.eq.s32.totalorder %s33, 0
      %p180 = por %p178, %p179
      %s182 = sadd.s32 %s181, 1
      %p185 = scmp.eq.s32.totalorder %s27, 3
      %p186 = scmp.ne.s32.totalorder %s181, %s183
      %p187 = scmp.eq.s32.totalorder %s27, 0
      %p188 = por %p186, %p187
      %p189 = scmp.ne.s32.totalorder %s181, %s183
      %p190 = scmp.eq.s32.totalorder %s32, 3
      %p191 = por %p189, %p190
      %p192 = scmp.ne.s32.totalorder %s183, %s184
      %p193 = scmp.eq.s32.totalorder %s32, 0
      %p194 = por %p192, %p193
      %p195 = scmp.ne.s32.totalorder %s183, %s184
      %p196 = scmp.eq.s32.totalorder %s33, 3
      %p197 = por %p195, %p196
      %p199 = scmp.ne.s32.totalorder %s184, %s198
      %p200 = scmp.eq.s32.totalorder %s33, 0
      %p201 = por %p199, %p200
      %s203 = sadd.s32 %s202, 1
      %p206 = scmp.eq.s32.totalorder %s27, 3
      %p207 = scmp.ne.s32.totalorder %s202, %s204
      %p208 = scmp.eq.s32.totalorder %s27, 0
      %p209 = por %p207, %p208
      %p210 = scmp.ne.s32.totalorder %s202, %s204
      %p211 = scmp.eq.s32.totalorder %s32, 3
      %p212 = por %p210, %p211
      %p213 = scmp.ne.s32.totalorder %s204, %s205
      %p214 = scmp.eq.s32.totalorder %s32, 0
      %p215 = por %p213, %p214
      %p216 = scmp.ne.s32.totalorder %s204, %s205
      %p217 = scmp.eq.s32.totalorder %s33, 3
      %p218 = por %p216, %p217
      %p220 = scmp.ne.s32.totalorder %s205, %s219
      %p221 = scmp.eq.s32.totalorder %s33, 0
      %p222 = por %p220, %p221
      %s224 = sadd.s32 %s223, 1
      %p227 = scmp.eq.s32.totalorder %s27, 3
      %p228 = scmp.ne.s32.totalorder %s223, %s225
      %p229 = scmp.eq.s32.totalorder %s27, 0
      %p230 = por %p228, %p229
      %p231 = scmp.ne.s32.totalorder %s223, %s225
      %p232 = scmp.eq.s32.totalorder %s32, 3
      %p233 = por %p231, %p232
      %p234 = scmp.ne.s32.totalorder %s225, %s226
      %p235 = scmp.eq.s32.totalorder %s32, 0
      %p236 = por %p234, %p235
      %p237 = scmp.ne.s32.totalorder %s225, %s226
      %p238 = scmp.eq.s32.totalorder %s33, 3
      %p239 = por %p237, %p238
      %p241 = scmp.ne.s32.totalorder %s226, %s240
      %p242 = scmp.eq.s32.totalorder %s33, 0
      %p243 = por %p241, %p242
      %s245 = sadd.s32 %s244, 1
      %p248 = scmp.eq.s32.totalorder %s27, 3
      %p249 = scmp.ne.s32.totalorder %s244, %s246
      %p250 = scmp.eq.s32.totalorder %s27, 0
      %p251 = por %p249, %p250
      %p252 = scmp.ne.s32.totalorder %s244, %s246
      %p253 = scmp.eq.s32.totalorder %s32, 3
      %p254 = por %p252, %p253
      %p255 = scmp.ne.s32.totalorder %s246, %s247
      %p256 = scmp.eq.s32.totalorder %s32, 0
      %p257 = por %p255, %p256
      %p258 = scmp.ne.s32.totalorder %s246, %s247
      %p259 = scmp.eq.s32.totalorder %s33, 3
      %p260 = por %p258, %p259
      %p262 = scmp.ne.s32.totalorder %s247, %s261
      %p263 = scmp.eq.s32.totalorder %s33, 0
      %p264 = por %p262, %p263
      %s266 = sadd.s32 %s265, 1
      %p269 = scmp.eq.s32.totalorder %s27, 3
      %p270 = scmp.ne.s32.totalorder %s265, %s267
      %p271 = scmp.eq.s32.totalorder %s27, 0
      %p272 = por %p270, %p271
      %p273 = scmp.ne.s32.totalorder %s265, %s267
      %p274 = scmp.eq.s32.totalorder %s32, 3
      %p275 = por %p273, %p274
      %p276 = scmp.ne.s32.totalorder %s267, %s268
      %p277 = scmp.eq.s32.totalorder %s32, 0
      %p278 = por %p276, %p277
      %p279 = scmp.ne.s32.totalorder %s267, %s268
      %p280 = scmp.eq.s32.totalorder %s33, 3
      %p281 = por %p279, %p280
      %p283 = scmp.ne.s32.totalorder %s268, %s282
      %p284 = scmp.eq.s32.totalorder %s33, 0
      %p285 = por %p283, %p284
      %s287 = sadd.s32 %s286, 1
      %p290 = scmp.eq.s32.totalorder %s27, 3
      %p291 = scmp.ne.s32.totalorder %s286, %s288
      %p292 = scmp.eq.s32.totalorder %s27, 0
      %p293 = por %p291, %p292
      %p294 = scmp.ne.s32.totalorder %s286, %s288
      %p295 = scmp.eq.s32.totalorder %s32, 3
      %p296 = por %p294, %p295
      %p297 = scmp.ne.s32.totalorder %s288, %s289
      %p298 = scmp.eq.s32.totalorder %s32, 0
      %p299 = por %p297, %p298
      %p300 = scmp.ne.s32.totalorder %s288, %s289
      %p301 = scmp.eq.s32.totalorder %s33, 3
      %p302 = por %p300, %p301
      %p304 = scmp.ne.s32.totalorder %s289, %s303
      %p305 = scmp.eq.s32.totalorder %s33, 0
      %p306 = por %p304, %p305
      %s308 = sadd.s32 %s307, 1
      %p311 = scmp.eq.s32.totalorder %s27, 3
      %p312 = scmp.ne.s32.totalorder %s307, %s309
      %p313 = scmp.eq.s32.totalorder %s27, 0
      %p314 = por %p312, %p313
      %p315 = scmp.ne.s32.totalorder %s307, %s309
      %p316 = scmp.eq.s32.totalorder %s32, 3
      %p317 = por %p315, %p316
      %p318 = scmp.ne.s32.totalorder %s309, %s310
      %p319 = scmp.eq.s32.totalorder %s32, 0
      %p320 = por %p318, %p319
      %p321 = scmp.ne.s32.totalorder %s309, %s310
      %p322 = scmp.eq.s32.totalorder %s33, 3
      %p323 = por %p321, %p322
      %p325 = scmp.ne.s32.totalorder %s310, %s324
      %p326 = scmp.eq.s32.totalorder %s33, 0
      %p327 = por %p325, %p326
      %s329 = sadd.s32 %s328, 1
      %p332 = scmp.eq.s32.totalorder %s27, 3
      %p333 = scmp.ne.s32.totalorder %s328, %s330
      %p334 = scmp.eq.s32.totalorder %s27, 0
      %p335 = por %p333, %p334
      %p336 = scmp.ne.s32.totalorder %s328, %s330
      %p337 = scmp.eq.s32.totalorder %s32, 3
      %p338 = por %p336, %p337
      %p339 = scmp.ne.s32.totalorder %s330, %s331
      %p340 = scmp.eq.s32.totalorder %s32, 0
      %p341 = por %p339, %p340
      %p342 = scmp.ne.s32.totalorder %s330, %s331
      %p343 = scmp.eq.s32.totalorder %s33, 3
      %p344 = por %p342, %p343
      %p346 = scmp.ne.s32.totalorder %s331, %s345
      %p347 = scmp.eq.s32.totalorder %s33, 0
      %p348 = por %p346, %p347
      %s350 = sadd.s32 %s349, 1
      %p353 = scmp.eq.s32.totalorder %s27, 3
      %p354 = scmp.ne.s32.totalorder %s349, %s351
      %p355 = scmp.eq.s32.totalorder %s27, 0
      %p356 = por %p354, %p355
      %p357 = scmp.ne.s32.totalorder %s349, %s351
      %p358 = scmp.eq.s32.totalorder %s32, 3
      %p359 = por %p357, %p358
      %p360 = scmp.ne.s32.totalorder %s351, %s352
      %p361 = scmp.eq.s32.totalorder %s32, 0
      %p362 = por %p360, %p361
      %p363 = scmp.ne.s32.totalorder %s351, %s352
      %p364 = scmp.eq.s32.totalorder %s33, 3
      %p365 = por %p363, %p364
      %p367 = scmp.ne.s32.totalorder %s352, %s366
      %p368 = scmp.eq.s32.totalorder %s33, 0
      %p369 = por %p367, %p368
      %s370 = ssub.s32 %s27, %s34
      %p371 = scmp.eq.s32.totalorder %s370, 0
      %s373 = sadd.s32 %s372, 1
      %s374 = scalar_select %p371, %s372, %s373
      %p377 = pneg %p371
      %p378 = scmp.eq.s32.totalorder %s27, 3
      %p379 = por %p377, %p378
      %p380 = scmp.ne.s32.totalorder %s372, %s375
      %p381 = scmp.eq.s32.totalorder %s27, 0
      %p382 = por %p380, %p381
      %p383 = scmp.ne.s32.totalorder %s372, %s375
      %p384 = scmp.eq.s32.totalorder %s32, 3
      %p385 = por %p383, %p384
      %p386 = scmp.ne.s32.totalorder %s375, %s376
      %p387 = scmp.eq.s32.totalorder %s32, 0
      %p388 = por %p386, %p387
      %p389 = scmp.ne.s32.totalorder %s375, %s376
      %p390 = scmp.eq.s32.totalorder %s33, 3
      %p391 = por %p389, %p390
      %p393 = scmp.ne.s32.totalorder %s376, %s392
      %p394 = scmp.eq.s32.totalorder %s33, 0
      %p395 = por %p393, %p394
      %p396 = scmp.le.s32.totalorder 1, %s27
      %p397 = scmp.lt.s32.totalorder %s27, 5
      %p398 = pnand %p396, %p397
      %p399 = pneg %p398
      // Predicated region
      $region9: #{tpu_custom_call.1} parent=5 // pred_check
        _
      $region10: #{tpu_custom_call.1} parent=5 // pred_check_branch
        %401 = sbr.rel (%p398) target = $region12
      $region11: #{tpu_custom_call.1} parent=5 // pred_region
        %s402 = ssub.s32 %s27, 1
        // Predicated region
        $region13: #{tpu_custom_call.1} parent=11 // pred_check
          %p403 = pneg %p152
        $region14: #{tpu_custom_call.1} parent=11 // pred_check_branch
          %405 = sbr.rel (%p403) target = $region16
        $region15: #{tpu_custom_call.1} parent=11 // pred_region
          _
        $region16: #{tpu_custom_call.1} parent=11 // pred_fallthru
          _
        // Predicated region
        $region17: #{tpu_custom_call.1} parent=11 // pred_check
          %p406 = pneg %p173
        $region18: #{tpu_custom_call.1} parent=11 // pred_check_branch
          %408 = sbr.rel (%p406) target = $region20
        $region19: #{tpu_custom_call.1} parent=11 // pred_region
          _
        $region20: #{tpu_custom_call.1} parent=11 // pred_fallthru
          _
        // Predicated region
        $region21: #{tpu_custom_call.1} parent=11 // pred_check
          %p409 = pneg %p194
        $region22: #{tpu_custom_call.1} parent=11 // pred_check_branch
          %411 = sbr.rel (%p409) target = $region24
        $region23: #{tpu_custom_call.1} parent=11 // pred_region
          %413 = vsyncadd [#allocation3], 0
          %s414 = sshll.u32 %s6, 4
          %s415 = int_to_ptr.hbm [resolvable:$true] %s414
          %s416 = sshll.u32 [#allocation2], 4
          %s417 = int_to_ptr.vmem [resolvable:$true] %s416
          %422 = dma.hbm_to_vmem [thread:$0]  %s415, 2048, %s417, [#allocation3], 128, 128, 8
        $region24: #{tpu_custom_call.1} parent=11 // pred_fallthru
          _
        // Predicated region
        $region25: #{tpu_custom_call.1} parent=11 // pred_check
          %p423 = pneg %p215
        $region26: #{tpu_custom_call.1} parent=11 // pred_check_branch
          %425 = sbr.rel (%p423) target = $region28
        $region27: #{tpu_custom_call.1} parent=11 // pred_region
          _
        $region28: #{tpu_custom_call.1} parent=11 // pred_fallthru
          _
        // Predicated region
        $region29: #{tpu_custom_call.1} parent=11 // pred_check
          %p426 = pneg %p236
        $region30: #{tpu_custom_call.1} parent=11 // pred_check_branch
          %428 = sbr.rel (%p426) target = $region32
        $region31: #{tpu_custom_call.1} parent=11 // pred_region
          %430 = vsyncadd [#allocation6], 0
          %s431 = sshll.u32 %s8, 4
          %s432 = int_to_ptr.hbm [resolvable:$true] %s431
          %s433 = sshll.u32 [#allocation5], 4
          %s434 = int_to_ptr.vmem [resolvable:$true] %s433
          %439 = dma.hbm_to_vmem [thread:$0]  %s432, 2048, %s434, [#allocation6], 128, 128, 8
        $region32: #{tpu_custom_call.1} parent=11 // pred_fallthru
          _
        // Predicated region
        $region33: #{tpu_custom_call.1} parent=11 // pred_check
          %p440 = pneg %p257
        $region34: #{tpu_custom_call.1} parent=11 // pred_check_branch
          %442 = sbr.rel (%p440) target = $region36
        $region35: #{tpu_custom_call.1} parent=11 // pred_region
          _
        $region36: #{tpu_custom_call.1} parent=11 // pred_fallthru
          _
        // Predicated region
        $region37: #{tpu_custom_call.1} parent=11 // pred_check
          %p443 = pneg %p278
        $region38: #{tpu_custom_call.1} parent=11 // pred_check_branch
          %445 = sbr.rel (%p443) target = $region40
        $region39: #{tpu_custom_call.1} parent=11 // pred_region
          _
        $region40: #{tpu_custom_call.1} parent=11 // pred_fallthru
          _
        // Predicated region
        $region41: #{tpu_custom_call.1} parent=11 // pred_check
          %p446 = pneg %p299
        $region42: #{tpu_custom_call.1} parent=11 // pred_check_branch
          %448 = sbr.rel (%p446) target = $region44
        $region43: #{tpu_custom_call.1} parent=11 // pred_region
          %450 = vsyncadd [#allocation6], 0
          %s451 = sshll.u32 %s11, 4
          %s452 = int_to_ptr.hbm [resolvable:$true] %s451
          %s453 = sshll.u32 [#allocation7], 4
          %s454 = int_to_ptr.vmem [resolvable:$true] %s453
          %459 = dma.hbm_to_vmem [thread:$0]  %s452, 2048, %s454, [#allocation6], 128, 128, 8
        $region44: #{tpu_custom_call.1} parent=11 // pred_fallthru
          _
        // Predicated region
        $region45: #{tpu_custom_call.1} parent=11 // pred_check
          %p460 = pneg %p320
        $region46: #{tpu_custom_call.1} parent=11 // pred_check_branch
          %462 = sbr.rel (%p460) target = $region48
        $region47: #{tpu_custom_call.1} parent=11 // pred_region
          _
        $region48: #{tpu_custom_call.1} parent=11 // pred_fallthru
          _
        // Predicated region
        $region49: #{tpu_custom_call.1} parent=11 // pred_check
          %p463 = pneg %p341
        $region50: #{tpu_custom_call.1} parent=11 // pred_check_branch
          %465 = sbr.rel (%p463) target = $region52
        $region51: #{tpu_custom_call.1} parent=11 // pred_region
          %467 = vsyncadd [#allocation9], 0
          %s468 = sshll.u32 %s13, 4
          %s469 = int_to_ptr.hbm [resolvable:$true] %s468
          %s470 = sshll.u32 [#allocation8], 4
          %s471 = int_to_ptr.vmem [resolvable:$true] %s470
          %476 = dma.hbm_to_vmem [thread:$0]  %s469, 2048, %s471, [#allocation9], 128, 128, 8
        $region52: #{tpu_custom_call.1} parent=11 // pred_fallthru
          _
        // Predicated region
        $region53: #{tpu_custom_call.1} parent=11 // pred_check
          %p477 = pneg %p362
        $region54: #{tpu_custom_call.1} parent=11 // pred_check_branch
          %479 = sbr.rel (%p477) target = $region56
        $region55: #{tpu_custom_call.1} parent=11 // pred_region
          _
        $region56: #{tpu_custom_call.1} parent=11 // pred_fallthru
          _
      $region12: #{tpu_custom_call.1} parent=5 // pred_fallthru
        _
      %p480 = scmp.lt.s32.totalorder %s27, 4
      // Predicated region
      $region57: #{tpu_custom_call.1} parent=5 // pred_check
        %p481 = pneg %p480
      $region58: #{tpu_custom_call.1} parent=5 // pred_check_branch
        %483 = sbr.rel (%p481) target = $region60
      $region59: #{tpu_custom_call.1} parent=5 // pred_region
        // Predicated region
        $region61: #{tpu_custom_call.1} parent=59 // pred_check
          %p484 = pneg %p47
        $region62: #{tpu_custom_call.1} parent=59 // pred_check_branch
          %486 = sbr.rel (%p484) target = $region64
        $region63: #{tpu_custom_call.1} parent=59 // pred_region
          %s487 = smul.u32 2, %s27
          %p488 = scmp.lt.s32.totalorder %s487, 7
          %s489 = scalar_select %p488, %s487, 7
          %s490 = smul.addr %s489, 8
          %s491 = scalar_lea.vmem %s0, %s490
          %s492 = smul.u32 2, %s27
        $region64: #{tpu_custom_call.1} parent=59 // pred_fallthru
          _
        // Predicated region
        $region65: #{tpu_custom_call.1} parent=59 // pred_check
          %p493 = pneg %p73
        $region66: #{tpu_custom_call.1} parent=59 // pred_check_branch
          %495 = sbr.rel (%p493) target = $region68
        $region67: #{tpu_custom_call.1} parent=59 // pred_region
          %s496 = smul.u32 2, %s27
          %p497 = scmp.lt.s32.totalorder %s496, 7
          %s498 = scalar_select %p497, %s496, 7
          %s499 = smul.addr %s498, 8
          %s500 = scalar_lea.vmem %s1, %s499
          %s501 = smul.u32 2, %s27
        $region68: #{tpu_custom_call.1} parent=59 // pred_fallthru
          _
        // Predicated region
        $region69: #{tpu_custom_call.1} parent=59 // pred_check
          %p502 = pneg %p99
        $region70: #{tpu_custom_call.1} parent=59 // pred_check_branch
          %504 = sbr.rel (%p502) target = $region72
        $region71: #{tpu_custom_call.1} parent=59 // pred_region
          %s505 = smul.u32 2, %s27
          %p506 = scmp.lt.s32.totalorder %s505, 7
          %s507 = scalar_select %p506, %s505, 7
          %s508 = smul.addr %s507, 8
          %s509 = scalar_lea.vmem %s2, %s508
          %s510 = smul.u32 2, %s27
        $region72: #{tpu_custom_call.1} parent=59 // pred_fallthru
          _
        // Predicated region
        $region73: #{tpu_custom_call.1} parent=59 // pred_check
          %p511 = pneg %p125
        $region74: #{tpu_custom_call.1} parent=59 // pred_check_branch
          %513 = sbr.rel (%p511) target = $region76
        $region75: #{tpu_custom_call.1} parent=59 // pred_region
          %s514 = smul.u32 2, %s27
          %p515 = scmp.lt.s32.totalorder %s514, 7
          %s516 = scalar_select %p515, %s514, 7
          %s517 = smul.addr %s516, 8
          %s518 = scalar_lea.vmem %s3, %s517
          %s519 = smul.u32 2, %s27
        $region76: #{tpu_custom_call.1} parent=59 // pred_fallthru
          _
      $region60: #{tpu_custom_call.1} parent=5 // pred_fallthru
        _
      %p520 = scmp.le.s32.totalorder 1, %s27
      %p521 = scmp.lt.s32.totalorder %s27, 5
      %p522 = pnand %p520, %p521
      %p523 = pneg %p522
      // Predicated region
      $region77: #{tpu_custom_call.1} parent=5 // pred_check
        _
      $region78: #{tpu_custom_call.1} parent=5 // pred_check_branch
        %525 = sbr.rel (%p522) target = $region80
      $region79: #{tpu_custom_call.1} parent=5 // pred_region
        %s526 = ssub.s32 %s27, 1
        // Predicated region
        $region81: #{tpu_custom_call.1} parent=79 // pred_check
          %p527 = pneg %p194
        $region82: #{tpu_custom_call.1} parent=79 // pred_check_branch
          %529 = sbr.rel (%p527) target = $region84
        $region83: #{tpu_custom_call.1} parent=79 // pred_region
          %531 = dma.done [#allocation3], 2048
        $region84: #{tpu_custom_call.1} parent=79 // pred_fallthru
          _
        // Predicated region
        $region85: #{tpu_custom_call.1} parent=79 // pred_check
          %p532 = pneg %p236
        $region86: #{tpu_custom_call.1} parent=79 // pred_check_branch
          %534 = sbr.rel (%p532) target = $region88
        $region87: #{tpu_custom_call.1} parent=79 // pred_region
          %536 = dma.done [#allocation6], 2048
        $region88: #{tpu_custom_call.1} parent=79 // pred_fallthru
          _
        // Predicated region
        $region89: #{tpu_custom_call.1} parent=79 // pred_check
          %p537 = pneg %p299
        $region90: #{tpu_custom_call.1} parent=79 // pred_check_branch
          %539 = sbr.rel (%p537) target = $region92
        $region91: #{tpu_custom_call.1} parent=79 // pred_region
          %541 = dma.done [#allocation6], 2048
        $region92: #{tpu_custom_call.1} parent=79 // pred_fallthru
          _
        // Predicated region
        $region93: #{tpu_custom_call.1} parent=79 // pred_check
          %p542 = pneg %p341
        $region94: #{tpu_custom_call.1} parent=79 // pred_check_branch
          %544 = sbr.rel (%p542) target = $region96
        $region95: #{tpu_custom_call.1} parent=79 // pred_region
          %546 = dma.done [#allocation9], 2048
        $region96: #{tpu_custom_call.1} parent=79 // pred_fallthru
          _
        %s547 = smul.u32 2, %s32
        %p548 = scmp.lt.s32.totalorder %s547, 7
        %s549 = scalar_select %p548, %s547, 7
        %s550 = smul.addr %s549, 8
        %s551 = scalar_lea.vmem %s0, %s550
        %p552 = pneg %p53
        %p553 = pneg %p50
        %s554 = smul.u32 2, %s32
        %p555 = scmp.lt.s32.totalorder %s554, 7
        %s556 = scalar_select %p555, %s554, 7
        %s557 = smul.addr %s556, 8
        %s558 = scalar_lea.vmem %s1, %s557
        %p559 = pneg %p79
        %p560 = pneg %p76
        %s561 = smul.u32 2, %s32
        %p562 = scmp.lt.s32.totalorder %s561, 7
        %s563 = scalar_select %p562, %s561, 7
        %s564 = smul.addr %s563, 8
        %s565 = scalar_lea.vmem %s2, %s564
        %p566 = pneg %p105
        %p567 = pneg %p102
        %s568 = smul.u32 2, %s32
        %p569 = scmp.lt.s32.totalorder %s568, 7
        %s570 = scalar_select %p569, %s568, 7
        %s571 = smul.addr %s570, 8
        %s572 = scalar_lea.vmem %s3, %s571
        %p573 = pneg %p131
        %p574 = pneg %p128
        %p575 = pneg %p152
        %p576 = pneg %p149
        %p577 = pneg %p173
        %p578 = pneg %p170
        %p579 = pneg %p194
        %p580 = pneg %p191
        %p581 = pneg %p215
        %p582 = pneg %p212
        %p583 = pneg %p236
        %p584 = pneg %p233
        %p585 = pneg %p257
        %p586 = pneg %p254
        %p587 = pneg %p278
        %p588 = pneg %p275
        %p589 = pneg %p299
        %p590 = pneg %p296
        %p591 = pneg %p320
        %p592 = pneg %p317
        %p593 = pneg %p341
        %p594 = pneg %p338
        %p595 = pneg %p362
        %p596 = pneg %p359
        %p597 = pneg %p388
        %p598 = pneg %p385
        %s599 = sand.u32 %s375, 1
        %s600 = scalar_lea.sflag [#allocation4], %s599
        %s601 = sand.u32 %s375, 1
        %s602 = smul.addr %s601, 16
        %s603 = scalar_lea.vmem [#allocation10], %s602
        %s604 = smul.u32 2, %s32
        %p605 = scmp.lt.s32.totalorder %s604, 7
        %s606 = scalar_select %p605, %s604, 7
        %s607 = smul.addr %s606, 8
        %s608 = scalar_lea.vmem %s0, %s607
        %s609 = smul.u32 2, %s32
        %s610 = smul.u32 2, %s32
        %p611 = scmp.lt.s32.totalorder %s610, 7
        %s612 = scalar_select %p611, %s610, 7
        %s613 = smul.addr %s612, 8
        %s614 = scalar_lea.vmem %s1, %s613
        %s615 = smul.u32 2, %s32
        %s616 = smul.u32 2, %s32
        %p617 = scmp.lt.s32.totalorder %s616, 7
        %s618 = scalar_select %p617, %s616, 7
        %s619 = smul.addr %s618, 8
        %s620 = scalar_lea.vmem %s2, %s619
        %s621 = smul.u32 2, %s32
        %s622 = smul.u32 2, %s32
        %p623 = scmp.lt.s32.totalorder %s622, 7
        %s624 = scalar_select %p623, %s622, 7
        %s625 = smul.addr %s624, 8
        %s626 = scalar_lea.vmem %s3, %s625
        %s627 = smul.u32 2, %s32
        %s628 = smul.u32 2, %s32
        %v629 = vld [vmem:[%s608] sm:$0xff]
        %v630 = vld [vmem:[%s608 + $0x8] sm:$0xff]
        %v631 = vld [vmem:[%s4] sm:$0xff]
        %v632 = vld [vmem:[%s4 + $0x8] sm:$0xff]
        %v633 = vld [vmem:[%s5] sm:$0x1]
        %v635 = vperm.slane %v633, 0
        %vm637 = vcmask 130048
        %v639 = vsel %vm637, %v629, 0
        %v642 = vsel %vm637, %v630, 0
        %644 = vmatpush.msra.mxu0 0.0
        %645 = vmatpush.msra.mxu0 0.0
        %646 = vmatpush.msra.mxu0 0.0
        %647 = vmatpush.msra.mxu0 0.0
        %648 = vmatpush.msra.mxu0 0.0
        %649 = vmatpush.msra.mxu0 0.0
        %650 = vmatpush.msra.mxu0 0.0
        %651 = vmatpush.msra.mxu0 0.0
        %652 = vmatpush.msra.mxu0 0.0
        %653 = vmatpush.msra.mxu0 0.0
        %654 = vmatpush.msra.mxu0 0.0
        %655 = vmatpush.msra.mxu0 0.0
        %656 = vmatpush.msra.mxu0 0.0
        %657 = vmatpush.msra.mxu0 0.0
        %658 = vmatpush.msra.mxu0 %v632
        %659 = vmatpush.msra.mxu0 %v631
        %660 = vmatmul.f32.gmra.mxu0 %v639
        %v661 = vpop.f32.mrf.mxu0
        %v662 = vadd.f32 %v635, %v661
        %663 = vmatmul.f32.gmra.mxu0 %v642
        %v664 = vpop.f32.mrf.mxu0
        %v665 = vadd.f32 %v635, %v664
        %666 = vdwg.mxu0
        %v667 = vmax.f32 %v662, 0.0
        %v668 = vmax.f32 %v665, 0.0
        %v669 = vld [vmem:[#allocation2] sm:$0xff]
        %v670 = vld [vmem:[#allocation2 + $0x8] sm:$0xff]
        %v671 = vld [vmem:[#allocation2 + $0x10] sm:$0xff]
        %v672 = vld [vmem:[#allocation2 + $0x18] sm:$0xff]
        %v673 = vld [vmem:[#allocation2 + $0x20] sm:$0xff]
        %v674 = vld [vmem:[#allocation2 + $0x28] sm:$0xff]
        %v675 = vld [vmem:[#allocation2 + $0x30] sm:$0xff]
        %v676 = vld [vmem:[#allocation2 + $0x38] sm:$0xff]
        %v677 = vld [vmem:[#allocation2 + $0x40] sm:$0xff]
        %v678 = vld [vmem:[#allocation2 + $0x48] sm:$0xff]
        %v679 = vld [vmem:[#allocation2 + $0x50] sm:$0xff]
        %v680 = vld [vmem:[#allocation2 + $0x58] sm:$0xff]
        %v681 = vld [vmem:[#allocation2 + $0x60] sm:$0xff]
        %v682 = vld [vmem:[#allocation2 + $0x68] sm:$0xff]
        %v683 = vld [vmem:[#allocation2 + $0x70] sm:$0xff]
        %v684 = vld [vmem:[#allocation2 + $0x78] sm:$0xff]
        %v685 = vld [vmem:[%s7] sm:$0x1]
        %v687 = vperm.slane %v685, 0
        %689 = vmatpush.msra.mxu0 %v684
        %690 = vmatpush.msra.mxu0 %v683
        %691 = vmatpush.msra.mxu0 %v682
        %692 = vmatpush.msra.mxu0 %v681
        %693 = vmatpush.msra.mxu0 %v680
        %694 = vmatpush.msra.mxu0 %v679
        %695 = vmatpush.msra.mxu0 %v678
        %696 = vmatpush.msra.mxu0 %v677
        %697 = vmatpush.msra.mxu0 %v676
        %698 = vmatpush.msra.mxu0 %v675
        %699 = vmatpush.msra.mxu0 %v674
        %700 = vmatpush.msra.mxu0 %v673
        %701 = vmatpush.msra.mxu0 %v672
        %702 = vmatpush.msra.mxu0 %v671
        %703 = vmatpush.msra.mxu0 %v670
        %704 = vmatpush.msra.mxu0 %v669
        %705 = vmatmul.f32.gmra.mxu0 %v667
        %v706 = vpop.f32.mrf.mxu0
        %v707 = vadd.f32 %v687, %v706
        %708 = vmatmul.f32.gmra.mxu0 %v668
        %v709 = vpop.f32.mrf.mxu0
        %v710 = vadd.f32 %v687, %v709
        %711 = vdwg.mxu0
        %v712 = vmax.f32 %v707, 0.0
        %v713 = vmax.f32 %v710, 0.0
        %v714 = vld [vmem:[%s614] sm:$0xff]
        %v715 = vld [vmem:[%s614 + $0x8] sm:$0xff]
        %v716 = vld [vmem:[%s620] sm:$0xff]
        %v717 = vld [vmem:[%s620 + $0x8] sm:$0xff]
        %v718 = vld [vmem:[%s626] sm:$0xff]
        %v719 = vld [vmem:[%s626 + $0x8] sm:$0xff]
        %722 = vrot.lane.b32.xlu0 %v716, 32
        %v723 = vpop.permute.xlu0 %722
        %724 = vrot.lane.b32.xlu0 %v717, 32
        %v725 = vpop.permute.xlu0 %724
        %728 = vrot.lane.b32.xlu0 %v716, 64
        %v729 = vpop.permute.xlu0 %728
        %730 = vrot.lane.b32.xlu0 %v717, 64
        %v731 = vpop.permute.xlu0 %730
        %736 = vrot.lane.b32.xlu0 %v718, 96
        %v737 = vpop.permute.xlu0 %736
        %738 = vrot.lane.b32.xlu0 %v719, 96
        %v739 = vpop.permute.xlu0 %738
        %742 = vrot.lane.b32.xlu0 %v718, 32
        %v743 = vpop.permute.xlu0 %742
        %744 = vrot.lane.b32.xlu0 %v719, 32
        %v745 = vpop.permute.xlu0 %744
        %vm748 = vcmask 261120
        %v749 = vsel %vm748, %v714, %v723
        %v750 = vsel %vm748, %v715, %v725
        %vm751 = vcmask 523264
        %v752 = vsel %vm751, %v749, %v729
        %v753 = vsel %vm751, %v750, %v731
        %vm754 = vcmask 785408
        %v755 = vsel %vm754, %v752, %v737
        %v756 = vsel %vm754, %v753, %v739
        %v757 = vsel %vm748, %v718, %v743
        %v758 = vsel %vm748, %v719, %v745
        %v759 = vsel %vm751, %v757, 0.0
        %v760 = vsel %vm751, %v758, 0.0
        %763 = vrot.lane.b32.xlu0 %v712, 32
        %v764 = vpop.permute.xlu0 %763
        %765 = vrot.lane.b32.xlu0 %v713, 32
        %v766 = vpop.permute.xlu0 %765
        %771 = vrot.lane.b32.xlu0 %v714, 64
        %v772 = vpop.permute.xlu0 %771
        %773 = vrot.lane.b32.xlu0 %v715, 64
        %v774 = vpop.permute.xlu0 %773
        %777 = vrot.lane.b32.xlu0 %v712, 96
        %v778 = vpop.permute.xlu0 %777
        %779 = vrot.lane.b32.xlu0 %v713, 96
        %v780 = vpop.permute.xlu0 %779
        %v783 = vsel %vm748, %v712, %v764
        %v784 = vsel %vm748, %v713, %v766
        %v785 = vsel %vm751, %v783, %v772
        %v786 = vsel %vm751, %v784, %v774
        %v787 = vsel %vm754, %v785, %v778
        %v788 = vsel %vm754, %v786, %v780
        %v789 = vsel %vm751, %v749, 0.0
        %v790 = vsel %vm751, %v750, 0.0
        %v791 = vmul.f32 %v755, %v787
        %v792 = vmul.f32 %v759, %v789
        %v793 = vmul.f32 %v756, %v788
        %v794 = vmul.f32 %v760, %v790
        %v795 = vld [vmem:[%s9] sm:$0xff]
        %v796 = vld [vmem:[%s9 + $0x8] sm:$0xff]
        %v797 = vld [vmem:[%s9 + $0x10] sm:$0xff]
        %v798 = vld [vmem:[%s9 + $0x18] sm:$0xff]
        %v799 = vld [vmem:[%s9 + $0x20] sm:$0xff]
        %v800 = vld [vmem:[%s9 + $0x28] sm:$0xff]
        %v801 = vld [vmem:[%s9 + $0x30] sm:$0xff]
        %v802 = vld [vmem:[%s9 + $0x38] sm:$0xff]
        %v803 = vld [vmem:[%s9 + $0x40] sm:$0xff]
        %v804 = vld [vmem:[%s9 + $0x48] sm:$0xff]
        %v805 = vld [vmem:[%s9 + $0x50] sm:$0xff]
        %v806 = vld [vmem:[%s9 + $0x58] sm:$0xff]
        %v807 = vld [vmem:[%s9 + $0x60] sm:$0xff]
        %v808 = vld [vmem:[%s9 + $0x68] sm:$0xff]
        %v809 = vld [vmem:[%s9 + $0x70] sm:$0xff]
        %v810 = vld [vmem:[%s9 + $0x78] sm:$0xff]
        %v811 = vld [vmem:[%s9 + $0x80] sm:$0xff]
        %v812 = vld [vmem:[%s9 + $0x88] sm:$0xff]
        %v813 = vld [vmem:[%s9 + $0x90] sm:$0xff]
        %v814 = vld [vmem:[%s9 + $0x98] sm:$0xff]
        %v815 = vld [vmem:[%s9 + $0xa0] sm:$0xff]
        %v816 = vld [vmem:[%s9 + $0xa8] sm:$0xff]
        %v817 = vld [vmem:[%s9 + $0xb0] sm:$0xff]
        %v818 = vld [vmem:[%s9 + $0xb8] sm:$0xff]
        %v819 = vld [vmem:[%s9 + $0xc0] sm:$0xff]
        %v820 = vld [vmem:[%s9 + $0xc8] sm:$0xff]
        %v821 = vld [vmem:[%s9 + $0xd0] sm:$0xff]
        %v822 = vld [vmem:[%s9 + $0xd8] sm:$0xff]
        %v823 = vld [vmem:[%s9 + $0xe0] sm:$0xff]
        %v824 = vld [vmem:[%s9 + $0xe8] sm:$0xff]
        %v825 = vld [vmem:[%s9 + $0xf0] sm:$0xff]
        %v826 = vld [vmem:[%s9 + $0xf8] sm:$0xff]
        %827 = vmatpush.msra.mxu0 %v810
        %828 = vmatpush.msra.mxu0 %v809
        %829 = vmatpush.msra.mxu0 %v808
        %830 = vmatpush.msra.mxu0 %v807
        %831 = vmatpush.msra.mxu0 %v806
        %832 = vmatpush.msra.mxu0 %v805
        %833 = vmatpush.msra.mxu0 %v804
        %834 = vmatpush.msra.mxu0 %v803
        %835 = vmatpush.msra.mxu0 %v802
        %836 = vmatpush.msra.mxu0 %v801
        %837 = vmatpush.msra.mxu0 %v800
        %838 = vmatpush.msra.mxu0 %v799
        %839 = vmatpush.msra.mxu0 %v798
        %840 = vmatpush.msra.mxu0 %v797
        %841 = vmatpush.msra.mxu0 %v796
        %842 = vmatpush.msra.mxu0 %v795
        %843 = vmatmul.f32.gmra.mxu0 %v791
        %v844 = vpop.f32.mrf.mxu0
        %v845 = vadd.f32 0.0, %v844
        %846 = vmatmul.f32.gmra.mxu0 %v793
        %v847 = vpop.f32.mrf.mxu0
        %v848 = vadd.f32 0.0, %v847
        %849 = vdwg.mxu0
        %850 = vmatpush.msra.mxu0 %v826
        %851 = vmatpush.msra.mxu0 %v825
        %852 = vmatpush.msra.mxu0 %v824
        %853 = vmatpush.msra.mxu0 %v823
        %854 = vmatpush.msra.mxu0 %v822
        %855 = vmatpush.msra.mxu0 %v821
        %856 = vmatpush.msra.mxu0 %v820
        %857 = vmatpush.msra.mxu0 %v819
        %858 = vmatpush.msra.mxu0 %v818
        %859 = vmatpush.msra.mxu0 %v817
        %860 = vmatpush.msra.mxu0 %v816
        %861 = vmatpush.msra.mxu0 %v815
        %862 = vmatpush.msra.mxu0 %v814
        %863 = vmatpush.msra.mxu0 %v813
        %864 = vmatpush.msra.mxu0 %v812
        %865 = vmatpush.msra.mxu0 %v811
        %866 = vmatmul.f32.gmra.mxu0 %v792
        %v867 = vpop.f32.mrf.mxu0
        %v868 = vadd.f32 %v845, %v867
        %869 = vmatmul.f32.gmra.mxu0 %v794
        %v870 = vpop.f32.mrf.mxu0
        %v871 = vadd.f32 %v848, %v870
        %872 = vdwg.mxu0
        %v873 = vld [vmem:[#allocation5] sm:$0xff]
        %v874 = vld [vmem:[#allocation5 + $0x8] sm:$0xff]
        %v875 = vld [vmem:[#allocation5 + $0x10] sm:$0xff]
        %v876 = vld [vmem:[#allocation5 + $0x18] sm:$0xff]
        %v877 = vld [vmem:[#allocation5 + $0x20] sm:$0xff]
        %v878 = vld [vmem:[#allocation5 + $0x28] sm:$0xff]
        %v879 = vld [vmem:[#allocation5 + $0x30] sm:$0xff]
        %v880 = vld [vmem:[#allocation5 + $0x38] sm:$0xff]
        %v881 = vld [vmem:[#allocation5 + $0x40] sm:$0xff]
        %v882 = vld [vmem:[#allocation5 + $0x48] sm:$0xff]
        %v883 = vld [vmem:[#allocation5 + $0x50] sm:$0xff]
        %v884 = vld [vmem:[#allocation5 + $0x58] sm:$0xff]
        %v885 = vld [vmem:[#allocation5 + $0x60] sm:$0xff]
        %v886 = vld [vmem:[#allocation5 + $0x68] sm:$0xff]
        %v887 = vld [vmem:[#allocation5 + $0x70] sm:$0xff]
        %v888 = vld [vmem:[#allocation5 + $0x78] sm:$0xff]
        %889 = vmatpush.msra.mxu0 %v888
        %890 = vmatpush.msra.mxu0 %v887
        %891 = vmatpush.msra.mxu0 %v886
        %892 = vmatpush.msra.mxu0 %v885
        %893 = vmatpush.msra.mxu0 %v884
        %894 = vmatpush.msra.mxu0 %v883
        %895 = vmatpush.msra.mxu0 %v882
        %896 = vmatpush.msra.mxu0 %v881
        %897 = vmatpush.msra.mxu0 %v880
        %898 = vmatpush.msra.mxu0 %v879
        %899 = vmatpush.msra.mxu0 %v878
        %900 = vmatpush.msra.mxu0 %v877
        %901 = vmatpush.msra.mxu0 %v876
        %902 = vmatpush.msra.mxu0 %v875
        %903 = vmatpush.msra.mxu0 %v874
        %904 = vmatpush.msra.mxu0 %v873
        %905 = vmatmul.f32.gmra.mxu0 %v712
        %v906 = vpop.f32.mrf.mxu0
        %v907 = vadd.f32 %v868, %v906
        %908 = vmatmul.f32.gmra.mxu0 %v713
        %v909 = vpop.f32.mrf.mxu0
        %v910 = vadd.f32 %v871, %v909
        %911 = vdwg.mxu0
        %v912 = vld [vmem:[%s10] sm:$0x1]
        %v914 = vperm.slane %v912, 0
        %v916 = vadd.f32 %v907, %v914
        %v917 = vadd.f32 %v910, %v914
        %v918 = vmax.f32 %v916, 0.0
        %v919 = vmax.f32 %v917, 0.0
        %v920 = vld [vmem:[#allocation7] sm:$0xff]
        %v921 = vld [vmem:[#allocation7 + $0x8] sm:$0xff]
        %v922 = vld [vmem:[#allocation7 + $0x10] sm:$0xff]
        %v923 = vld [vmem:[#allocation7 + $0x18] sm:$0xff]
        %v924 = vld [vmem:[#allocation7 + $0x20] sm:$0xff]
        %v925 = vld [vmem:[#allocation7 + $0x28] sm:$0xff]
        %v926 = vld [vmem:[#allocation7 + $0x30] sm:$0xff]
        %v927 = vld [vmem:[#allocation7 + $0x38] sm:$0xff]
        %v928 = vld [vmem:[#allocation7 + $0x40] sm:$0xff]
        %v929 = vld [vmem:[#allocation7 + $0x48] sm:$0xff]
        %v930 = vld [vmem:[#allocation7 + $0x50] sm:$0xff]
        %v931 = vld [vmem:[#allocation7 + $0x58] sm:$0xff]
        %v932 = vld [vmem:[#allocation7 + $0x60] sm:$0xff]
        %v933 = vld [vmem:[#allocation7 + $0x68] sm:$0xff]
        %v934 = vld [vmem:[#allocation7 + $0x70] sm:$0xff]
        %v935 = vld [vmem:[#allocation7 + $0x78] sm:$0xff]
        %v936 = vld [vmem:[%s12] sm:$0x1]
        %v938 = vperm.slane %v936, 0
        %940 = vmatpush.msra.mxu0 %v935
        %941 = vmatpush.msra.mxu0 %v934
        %942 = vmatpush.msra.mxu0 %v933
        %943 = vmatpush.msra.mxu0 %v932
        %944 = vmatpush.msra.mxu0 %v931
        %945 = vmatpush.msra.mxu0 %v930
        %946 = vmatpush.msra.mxu0 %v929
        %947 = vmatpush.msra.mxu0 %v928
        %948 = vmatpush.msra.mxu0 %v927
        %949 = vmatpush.msra.mxu0 %v926
        %950 = vmatpush.msra.mxu0 %v925
        %951 = vmatpush.msra.mxu0 %v924
        %952 = vmatpush.msra.mxu0 %v923
        %953 = vmatpush.msra.mxu0 %v922
        %954 = vmatpush.msra.mxu0 %v921
        %955 = vmatpush.msra.mxu0 %v920
        %956 = vmatmul.f32.gmra.mxu0 %v918
        %v957 = vpop.f32.mrf.mxu0
        %v958 = vadd.f32 %v938, %v957
        %959 = vmatmul.f32.gmra.mxu0 %v919
        %v960 = vpop.f32.mrf.mxu0
        %v961 = vadd.f32 %v938, %v960
        %962 = vdwg.mxu0
        %v963 = vmax.f32 %v958, 0.0
        %v964 = vmax.f32 %v961, 0.0
        %v965 = vld [vmem:[#allocation8] sm:$0xff]
        %v966 = vld [vmem:[#allocation8 + $0x8] sm:$0xff]
        %v967 = vld [vmem:[#allocation8 + $0x10] sm:$0xff]
        %v968 = vld [vmem:[#allocation8 + $0x18] sm:$0xff]
        %v969 = vld [vmem:[#allocation8 + $0x20] sm:$0xff]
        %v970 = vld [vmem:[#allocation8 + $0x28] sm:$0xff]
        %v971 = vld [vmem:[#allocation8 + $0x30] sm:$0xff]
        %v972 = vld [vmem:[#allocation8 + $0x38] sm:$0xff]
        %v973 = vld [vmem:[#allocation8 + $0x40] sm:$0xff]
        %v974 = vld [vmem:[#allocation8 + $0x48] sm:$0xff]
        %v975 = vld [vmem:[#allocation8 + $0x50] sm:$0xff]
        %v976 = vld [vmem:[#allocation8 + $0x58] sm:$0xff]
        %v977 = vld [vmem:[#allocation8 + $0x60] sm:$0xff]
        %v978 = vld [vmem:[#allocation8 + $0x68] sm:$0xff]
        %v979 = vld [vmem:[#allocation8 + $0x70] sm:$0xff]
        %v980 = vld [vmem:[#allocation8 + $0x78] sm:$0xff]
        %v981 = vld [vmem:[%s14] sm:$0x1]
        %v983 = vperm.slane %v981, 0
        %985 = vmatpush.msra.mxu0 %v980
        %986 = vmatpush.msra.mxu0 %v979
        %987 = vmatpush.msra.mxu0 %v978
        %988 = vmatpush.msra.mxu0 %v977
        %989 = vmatpush.msra.mxu0 %v976
        %990 = vmatpush.msra.mxu0 %v975
        %991 = vmatpush.msra.mxu0 %v974
        %992 = vmatpush.msra.mxu0 %v973
        %993 = vmatpush.msra.mxu0 %v972
        %994 = vmatpush.msra.mxu0 %v971
        %995 = vmatpush.msra.mxu0 %v970
        %996 = vmatpush.msra.mxu0 %v969
        %997 = vmatpush.msra.mxu0 %v968
        %998 = vmatpush.msra.mxu0 %v967
        %999 = vmatpush.msra.mxu0 %v966
        %1000 = vmatpush.msra.mxu0 %v965
        %1001 = vmatmul.f32.gmra.mxu0 %v963
        %v1002 = vpop.f32.mrf.mxu0
        %v1003 = vadd.f32 %v983, %v1002
        %1004 = vmatmul.f32.gmra.mxu0 %v964
        %v1005 = vpop.f32.mrf.mxu0
        %v1006 = vadd.f32 %v983, %v1005
        %1007 = vdwg.mxu0
        %1008 = vst [vmem:[%s603] sm:$0xff] %v1003
        %1009 = vst [vmem:[%s603 + $0x8] sm:$0xff] %v1006
        %s1010 = sand.u32 %s375, 1
        %s1011 = scalar_lea.sflag [#allocation4], %s1010
        %s1012 = sand.u32 %s375, 1
        %s1013 = smul.addr %s1012, 16
        %s1014 = scalar_lea.vmem [#allocation10], %s1013
        // Predicated region
        $region97: #{tpu_custom_call.1} parent=79 // pred_check
          %p1015 = pneg %p385
        $region98: #{tpu_custom_call.1} parent=79 // pred_check_branch
          %1017 = sbr.rel (%p1015) target = $region100
        $region99: #{tpu_custom_call.1} parent=79 // pred_region
          %s1018 = smul.u32 2, %s32
          %1020 = vsyncadd %s1011, 0
          %s1021 = smul.addr %s1018, 8
          %s1022 = scalar_lea.hbm %s15, %s1021
          %s1023 = sshll.u32 %s1014, 4
          %s1024 = int_to_ptr.vmem [resolvable:$true] %s1023
          %s1025 = sshll.u32 %s1022, 4
          %s1026 = int_to_ptr.hbm [resolvable:$true] %s1025
          %1031 = dma.vmem_to_hbm [thread:$0]  %s1024, 256, %s1026, %s1011, 128, 128, 8
        $region100: #{tpu_custom_call.1} parent=79 // pred_fallthru
          _
      $region80: #{tpu_custom_call.1} parent=5 // pred_fallthru
        _
      %p1032 = scmp.le.s32.totalorder 2, %s27
      // Predicated region
      $region101: #{tpu_custom_call.1} parent=5 // pred_check
        %p1033 = pneg %p1032
      $region102: #{tpu_custom_call.1} parent=5 // pred_check_branch
        %1035 = sbr.rel (%p1033) target = $region104
      $region103: #{tpu_custom_call.1} parent=5 // pred_region
        %s1036 = ssub.s32 %s27, 2
        // Predicated region
        $region105: #{tpu_custom_call.1} parent=103 // pred_check
          %p1037 = pneg %p391
        $region106: #{tpu_custom_call.1} parent=103 // pred_check_branch
          %1039 = sbr.rel (%p1037) target = $region108
        $region107: #{tpu_custom_call.1} parent=103 // pred_region
          %s1040 = sand.u32 %s376, 1
          %s1041 = scalar_lea.sflag [#allocation4], %s1040
          %s1042 = sand.u32 %s376, 1
          %s1043 = smul.addr %s1042, 16
          %s1044 = scalar_lea.vmem [#allocation10], %s1043
          %1046 = dma.done %s1041, 256
        $region108: #{tpu_custom_call.1} parent=103 // pred_fallthru
          _
      $region104: #{tpu_custom_call.1} parent=5 // pred_fallthru
        _
    $region6: #{tpu_custom_call.1} parent=1 // loop_footer
      %s31 = sadd.s32 1, %s27
    $region7: #{tpu_custom_call.1} parent=1 // loop_footer_branch
      %26 = sbr.rel target = $region3
    $region8: #{tpu_custom_call.1} parent=1 // loop_exit
      _
    %1047 = vsyncpa [#allocation3], 1
    %s1048 = scalar_lea.sflag [#allocation3], 1
    %1049 = vsyncpa %s1048, 1
    %1050 = vsyncpa [#allocation6], 1
    %1051 = vsyncpa [#allocation9], 1
    %1052 = vsyncpa [#allocation4], 1
    %s1053 = scalar_lea.sflag [#allocation4], 1
    %1054 = vsyncpa %s1053, 1

</llo_original>
